<compile_context>
chip_gen: v7x
topology: tpu7x:2x2x1
jax: 0.10.0
libtpu: 0.0.40
codegen_flags: <defaults>
</compile_context>

<pallas_src>
import functools

import jax
import jax.numpy as jnp
from jax.experimental import pallas as pl
from jax.experimental.pallas import tpu as pltpu

SP = 128  # one full 128-lane tile


# ---------------------------------------------------------------------------
# Pass 1 (one-time, streamed over node chunks, "arbitrary" reduction axis):
#   outputs
#     v_rep [N, 128]  : value projection, head block replicated to 128 lanes
#     bnum  [128,128] : attention-numerator matrix, replicated column layout
#     bden  [128,128] : attention-denominator matrix, replicated column layout
#   such that for augmented query rows q_aug = [1 | Q | 0]:
#     q_aug @ bnum = attention numerator, q_aug @ bden = attention normalizer.
# ---------------------------------------------------------------------------
def global_kernel(x_ref, w_ref, b_ref, mask_ref, sel_num_ref, sel_den_ref,
                  lmask_ref, vrep_ref, bnum_ref, bden_ref,
                  p_acc, ksq_acc, qsq_acc):
    i = pl.program_id(0)

    @pl.when(i == 0)
    def _():
        p_acc[...] = jnp.zeros_like(p_acc)
        ksq_acc[...] = jnp.zeros_like(ksq_acc)
        qsq_acc[...] = jnp.zeros_like(qsq_acc)

    # One fused projection; sections [ V_rep | V_aug | K_aug | Q_aug ], each
    # 128 lanes.  V_aug = [V | 1 | 0], K_aug = [1 | K | 0], Q_aug = [1 | Q | 0]
    # (the constant-1 lanes come from the bias), so the single K_aug^T @ V_aug
    # matmul also produces vs_sum, ks_sum and N on the MXU.
    proj = jnp.dot(x_ref[...], w_ref[...],
                   preferred_element_type=jnp.float32) + b_ref[...]
    v_rep = proj[:, 0 * SP:1 * SP]
    v_aug = proj[:, 1 * SP:2 * SP]
    k_aug = proj[:, 2 * SP:3 * SP]
    q_aug = proj[:, 3 * SP:4 * SP]

    vrep_ref[...] = v_rep
    p_acc[...] += jax.lax.dot_general(
        k_aug, v_aug, (((0,), (0,)), ((), ())),
        preferred_element_type=jnp.float32)
    ksq_acc[...] += jnp.sum(k_aug * k_aug, axis=0, keepdims=True)
    qsq_acc[...] += jnp.sum(q_aug * q_aug, axis=0, keepdims=True)

    @pl.when(i == pl.num_programs(0) - 1)
    def _():
        # Frobenius norms over the Q / K lanes only (lane mask; no N
        # subtraction -> no catastrophic cancellation).
        lm = lmask_ref[...]
        k_sq = jnp.sum(ksq_acc[...] * lm)
        q_sq = jnp.sum(qsq_acc[...] * lm)
        qk_scale = jax.lax.rsqrt(k_sq * q_sq)      # 1 / (||Q||_F * ||K||_F)
        row_ids = jax.lax.broadcasted_iota(jnp.int32, (SP, 1), 0)
        row_scale = jnp.where(row_ids == 0, 1.0, qk_scale)
        m = mask_ref[...] * row_scale               # head block-diag + sum row
        p = p_acc[...]
        # sel_* replicate / select P's columns into the 128-lane layout on the
        # MXU (no sub-128-lane slices or concats).
        bnum_ref[...] = jnp.dot(p, sel_num_ref[...],
                                preferred_element_type=jnp.float32) * m
        bden_ref[...] = jnp.dot(p, sel_den_ref[...],
                                preferred_element_type=jnp.float32) * m


# ---------------------------------------------------------------------------
# Pass 2 (row-tiled, "parallel"): per-tile attention + GCN + epilogue, fully
# 128-lane dense (unmasked stores).
# ---------------------------------------------------------------------------
def tile_kernel(x_ref, xo_ref, wq_ref, bq_ref, bnum_ref, bden_ref,
                vrep_ref, adj_ref, hmean_ref, repmat_ref, gamma_ref, beta_ref,
                out_ref, *, graph_weight, alpha, ln_eps):
    # augmented query rows [1 | Q | 0] for this row tile (bias lane 0 = 1)
    q_rows = jnp.dot(x_ref[...], wq_ref[...],
                     preferred_element_type=jnp.float32) + bq_ref[...]
    r_num = jnp.dot(q_rows, bnum_ref[...], preferred_element_type=jnp.float32)
    r_den = jnp.dot(q_rows, bden_ref[...], preferred_element_type=jnp.float32)

    # approx reciprocal (EUP slot) + one Newton step to recover precision.
    recip = pl.reciprocal(r_den, approx=True)
    recip = recip * (2.0 - r_den * recip)
    attn = r_num * recip                                        # [TM, 128]

    # GCN branch: dense normalized adjacency tile @ replicated V slab.
    gcn = jnp.dot(adj_ref[...], vrep_ref[...],
                  preferred_element_type=jnp.float32)           # [TM, 128]

    combined = (1.0 - graph_weight) * attn + graph_weight * gcn

    # Head mean (alpha already folded into hmean) + residual/source mix, both
    # via tiny matmuls so the epilogue stays 128-lane dense.
    mix = xo_ref[...] * alpha + x_ref[...] * (1.0 - alpha)      # [TM, dim_in]
    out = (jnp.dot(combined, hmean_ref[...], preferred_element_type=jnp.float32)
           + jnp.dot(mix, repmat_ref[...], preferred_element_type=jnp.float32))

    # LayerNorm over dim_out (lane replication leaves mean/var unchanged);
    # dropout is eval-mode identity.
    mu = jnp.mean(out, axis=-1, keepdims=True)
    d = out - mu
    var = jnp.mean(d * d, axis=-1, keepdims=True)
    out = d * jax.lax.rsqrt(var + ln_eps)
    out_ref[...] = out * gamma_ref[...] + beta_ref[...]          # dense store


def _vmem_limit(resident_f32_words):
    est = 8 * resident_f32_words + (4 << 20)   # 2x double-buffer * 4B + slack
    return int(min(max(est, 32 << 20), 64 << 20))


@functools.partial(jax.jit, static_argnames=(
    "n_heads", "dim_out", "graph_weight", "alpha", "row_tile", "chunk"))
def difformer_forward(x, x_orig, params, adj, *, n_heads, dim_out,
                      graph_weight, alpha, row_tile=None, chunk=None):
    n_nodes, dim_in = x.shape
    hd = n_heads * dim_out
    f32 = jnp.float32
    assert dim_in == dim_out, "residual path requires dim_in == dim_out"
    assert hd <= SP and SP % hd == 0 and SP % dim_out == 0

    if row_tile is None:
        row_tile = min(128, n_nodes)     # fill the MXU M dimension
    if chunk is None:
        chunk = min(512, n_nodes)
    assert n_nodes % row_tile == 0 and row_tile % 8 == 0
    assert n_nodes % chunk == 0 and chunk % 8 == 0

    rep_v = SP // hd                      # V-slab head-block replication

    # ---- fused projection weight [dim_in, 4*SP]:
    #      [ V_rep | V_aug | K_aug | Q_aug ]  (constant-1 lanes live in bias)
    w4 = jnp.zeros((dim_in, 4 * SP), f32)
    b4 = jnp.zeros((1, 4 * SP), f32)
    for g in range(rep_v):                                      # V_rep section
        w4 = w4.at[:, g * hd:(g + 1) * hd].set(params["wv"])
        b4 = b4.at[:, g * hd:(g + 1) * hd].set(params["bv"])
    w4 = w4.at[:, SP:SP + hd].set(params["wv"])                 # V_aug = [V|1|0]
    b4 = b4.at[:, SP:SP + hd].set(params["bv"])
    b4 = b4.at[:, SP + hd].set(1.0)
    w4 = w4.at[:, 2 * SP + 1:2 * SP + 1 + hd].set(params["wk"])  # K_aug = [1|K|0]
    b4 = b4.at[:, 2 * SP + 1:2 * SP + 1 + hd].set(params["bk"])
    b4 = b4.at[:, 2 * SP].set(1.0)
    w4 = w4.at[:, 3 * SP + 1:3 * SP + 1 + hd].set(params["wq"])  # Q_aug = [1|Q|0]
    b4 = b4.at[:, 3 * SP + 1:3 * SP + 1 + hd].set(params["bq"])
    b4 = b4.at[:, 3 * SP].set(1.0)

    # ---- per-tile query projection weight / bias: [0 | Wq | 0], bias lane0=1
    wq_pad = jnp.zeros((dim_in, SP), f32).at[:, 1:1 + hd].set(params["wq"])
    bq_pad = (jnp.zeros((1, SP), f32).at[:, 0].set(1.0)
              .at[:, 1:1 + hd].set(params["bq"]))

    # ---- static selection / mask / replication matrices
    lane = jnp.arange(SP)
    col_head = (lane % hd) // dim_out
    row_head = (lane - 1) // dim_out
    row_valid = (lane >= 1) & (lane <= hd)
    blk = (row_head[:, None] == col_head[None, :]) & row_valid[:, None]
    mask = jnp.where(lane[:, None] == 0, 1.0, blk.astype(f32))      # [SP, SP]
    sel_num = (lane[:, None] == (lane[None, :] % hd)).astype(f32)   # [SP, SP]
    sel_den = jnp.broadcast_to((lane[:, None] == hd).astype(f32), (SP, SP))
    lmask = row_valid.astype(f32)[None, :]                          # Q/K lanes

    # head-mean-and-replicate (alpha folded in) and residual replication mats
    hmean_a = (((lane[:, None] % dim_out) == (lane[None, :] % dim_out))
               .astype(f32)) * (float(alpha) * dim_out / SP)         # [SP, SP]
    repmat = (jnp.arange(dim_out)[:, None] == (lane[None, :] % dim_out)
              ).astype(f32)                                          # [do, SP]
    gamma_rep = jnp.tile(params["gamma"], (1, SP // dim_out))        # [1, SP]
    beta_rep = jnp.tile(params["beta"], (1, SP // dim_out))

    # ------------------------- pass 1: hoisted globals -------------------------
    g1 = (n_nodes // chunk,)
    cost1 = pl.CostEstimate(
        flops=int(2 * n_nodes * dim_in * 4 * SP + 2 * n_nodes * SP * SP
                  + 2 * 2 * SP * SP * SP),
        transcendentals=1,
        bytes_accessed=int(4 * (n_nodes * dim_in + dim_in * 4 * SP + 4 * SP
                                + 3 * SP * SP + SP + n_nodes * SP
                                + 2 * SP * SP)))
    vmem1 = _vmem_limit(chunk * dim_in + dim_in * 4 * SP + 4 * SP
                        + 3 * SP * SP + SP + chunk * SP + 2 * SP * SP
                        + SP * SP + 2 * SP + chunk * 4 * SP)
    v_rep, bnum, bden = pl.pallas_call(
        global_kernel,
        out_shape=(jax.ShapeDtypeStruct((n_nodes, SP), f32),
                   jax.ShapeDtypeStruct((SP, SP), f32),
                   jax.ShapeDtypeStruct((SP, SP), f32)),
        grid=g1,
        in_specs=[
            pl.BlockSpec((chunk, dim_in), lambda i: (i, 0)),     # x chunk
            pl.BlockSpec((dim_in, 4 * SP), lambda i: (0, 0)),    # W4
            pl.BlockSpec((1, 4 * SP), lambda i: (0, 0)),         # b4
            pl.BlockSpec((SP, SP), lambda i: (0, 0)),            # head mask
            pl.BlockSpec((SP, SP), lambda i: (0, 0)),            # sel_num
            pl.BlockSpec((SP, SP), lambda i: (0, 0)),            # sel_den
            pl.BlockSpec((1, SP), lambda i: (0, 0)),             # Q/K lane mask
        ],
        out_specs=(pl.BlockSpec((chunk, SP), lambda i: (i, 0)),  # V_rep
                   pl.BlockSpec((SP, SP), lambda i: (0, 0)),     # bnum
                   pl.BlockSpec((SP, SP), lambda i: (0, 0))),    # bden
        scratch_shapes=[pltpu.VMEM((SP, SP), f32),               # P accumulator
                        pltpu.VMEM((1, SP), f32),                # ||K||^2 lanes
                        pltpu.VMEM((1, SP), f32)],               # ||Q||^2 lanes
        compiler_params=pltpu.CompilerParams(
            dimension_semantics=("arbitrary",),
            vmem_limit_bytes=vmem1),
        cost_estimate=cost1,
    )(x, w4, b4, mask, sel_num, sel_den, lmask)

    # ------------------------- pass 2: row-tiled hot loop ----------------------
    g2 = (n_nodes // row_tile,)
    kern2 = functools.partial(tile_kernel, graph_weight=float(graph_weight),
                              alpha=float(alpha), ln_eps=1e-5)
    cost2 = pl.CostEstimate(
        flops=int(2 * n_nodes * (dim_in * SP + 2 * SP * SP + n_nodes * SP
                                 + SP * SP + dim_in * SP)),
        transcendentals=int(n_nodes * SP),
        bytes_accessed=int(4 * (2 * n_nodes * dim_in + n_nodes * n_nodes
                                + n_nodes * SP + dim_in * SP + dim_out * SP
                                + 3 * SP * SP + 4 * SP + n_nodes * SP)))
    vmem2 = _vmem_limit(2 * row_tile * dim_in + dim_in * SP + SP + 2 * SP * SP
                        + n_nodes * SP + row_tile * n_nodes + SP * SP
                        + dim_out * SP + 2 * SP + 7 * row_tile * SP)
    out = pl.pallas_call(
        kern2,
        out_shape=jax.ShapeDtypeStruct((n_nodes, SP), f32),
        grid=g2,
        in_specs=[
            pl.BlockSpec((row_tile, dim_in), lambda i: (i, 0)),   # x tile
            pl.BlockSpec((row_tile, dim_in), lambda i: (i, 0)),   # x_orig tile
            pl.BlockSpec((dim_in, SP), lambda i: (0, 0)),         # Wq (padded)
            pl.BlockSpec((1, SP), lambda i: (0, 0)),              # bq (padded)
            pl.BlockSpec((SP, SP), lambda i: (0, 0)),             # bnum
            pl.BlockSpec((SP, SP), lambda i: (0, 0)),             # bden
            pl.BlockSpec((n_nodes, SP), lambda i: (0, 0)),        # V_rep (full)
            pl.BlockSpec((row_tile, n_nodes), lambda i: (i, 0)),  # adj row tile
            pl.BlockSpec((SP, SP), lambda i: (0, 0)),             # hmean*alpha
            pl.BlockSpec((dim_out, SP), lambda i: (0, 0)),        # repmat
            pl.BlockSpec((1, SP), lambda i: (0, 0)),              # gamma
            pl.BlockSpec((1, SP), lambda i: (0, 0)),              # beta
        ],
        out_specs=pl.BlockSpec((row_tile, SP), lambda i: (i, 0)),
        compiler_params=pltpu.CompilerParams(
            dimension_semantics=("parallel",),   # v7x: 2 TCs split row tiles
            vmem_limit_bytes=vmem2),
        cost_estimate=cost2,
    )(x, x_orig, wq_pad, bq_pad, bnum, bden, v_rep, adj, hmean_a, repmat,
      gamma_rep, beta_rep)

    return out[:, :dim_out]


def reference(x, x_orig, p, adj, n_heads, dim_out, graph_weight, alpha):
    """Pure-JAX mirror of the PyTorch forward (for correctness check)."""
    q = (x @ p["wq"] + p["bq"]).reshape(-1, n_heads, dim_out)
    k = (x @ p["wk"] + p["bk"]).reshape(-1, n_heads, dim_out)
    v = (x @ p["wv"] + p["bv"]).reshape(-1, n_heads, dim_out)
    qs = q / jnp.linalg.norm(q)
    ks = k / jnp.linalg.norm(k)
    n_nodes = qs.shape[0]
    kvs = jnp.einsum("lhm,lhd->hmd", ks, v)
    num = jnp.einsum("nhm,hmd->nhd", qs, kvs) + jnp.sum(v, axis=0)[None]
    ks_sum = jnp.sum(ks, axis=0)
    denom = jnp.einsum("nhm,hm->nh", qs, ks_sum)[..., None] + n_nodes
    attn_out = num / denom
    gcn = jnp.einsum("nl,lhd->nhd", adj, v)
    final = (1 - graph_weight) * attn_out + graph_weight * gcn
    final = final.mean(axis=1)
    final = final + x_orig
    final = final * alpha + x * (1 - alpha)
    mu = final.mean(-1, keepdims=True)
    var = ((final - mu) ** 2).mean(-1, keepdims=True)
    final = (final - mu) / jnp.sqrt(var + 1e-5)
    return final * p["gamma"][0] + p["beta"][0]


def build_gcn_adj(edge_index, n_nodes):
    """Dense normalized adjacency matching gcn_conv's SparseTensor semantics."""
    row, col = edge_index
    deg = jnp.zeros((n_nodes,), jnp.float32).at[col].add(1.0)   # degree(col, N)
    d_norm_in = 1.0 / jnp.sqrt(deg[col])
    d_norm_out = 1.0 / jnp.sqrt(deg[row])
    w = d_norm_in * d_norm_out
    w = jnp.nan_to_num(w, nan=0.0, posinf=0.0, neginf=0.0)
    # SparseTensor(row=col, col=row, value=w): adj[col_e, row_e] += w_e
    adj = jnp.zeros((n_nodes, n_nodes), jnp.float32).at[col, row].add(w)
    return adj


if __name__ == "__main__":
    N, DIM_IN, DIM_OUT, H = 64, 32, 32, 2
    GRAPH_WEIGHT, ALPHA = 0.5, 0.5

    key = jax.random.PRNGKey(0)
    keys = jax.random.split(key, 8)
    bound = 1.0 / jnp.sqrt(jnp.float32(DIM_IN))

    def lin_init(kw, kb):
        w = jax.random.uniform(kw, (DIM_IN, H * DIM_OUT), jnp.float32, -bound, bound)
        b = jax.random.uniform(kb, (1, H * DIM_OUT), jnp.float32, -bound, bound)
        return w, b

    wq, bq = lin_init(keys[0], keys[1])
    wk, bk = lin_init(keys[2], keys[3])
    wv, bv = lin_init(keys[4], keys[5])
    params = {
        "wq": wq, "bq": bq, "wk": wk, "bk": bk, "wv": wv, "bv": bv,
        "gamma": jnp.ones((1, DIM_OUT), jnp.float32),
        "beta": jnp.zeros((1, DIM_OUT), jnp.float32),
    }

    x = jax.random.normal(keys[6], (N, DIM_IN), jnp.float32)
    x_orig = jax.random.normal(keys[7], (N, DIM_IN), jnp.float32)

    # Deterministic ring graph (bidirectional edges).
    idx = jnp.arange(N, dtype=jnp.int32)
    row = jnp.concatenate([idx, (idx + 1) % N])
    col = jnp.concatenate([(idx + 1) % N, idx])
    adj = build_gcn_adj((row, col), N)

    out = difformer_forward(x, x_orig, params, adj,
                            n_heads=H, dim_out=DIM_OUT,
                            graph_weight=GRAPH_WEIGHT, alpha=ALPHA)
    out = jax.block_until_ready(out)

    # Reference at full f32 matmul precision (avoids XLA's default bf16
    # operand truncation on TPU skewing the comparison).
    with jax.default_matmul_precision("highest"):
        ref = reference(x, x_orig, params, adj, H, DIM_OUT, GRAPH_WEIGHT, ALPHA)
        ref = jax.block_until_ready(ref)

    assert out.shape == (N, DIM_OUT)
    assert jnp.allclose(out, ref, atol=1e-4, rtol=1e-4), \
        float(jnp.max(jnp.abs(out - ref)))

    print("KERNEL_OK")
</pallas_src>

<mosaic_0001>
module attributes {stable_mosaic.version = 11 : i64} {
  func.func @global_kernel(%arg0: i32, %arg1: memref<64x32xf32, #tpu.memory_space<vmem>>, %arg2: memref<32x512xf32, #tpu.memory_space<vmem>>, %arg3: memref<1x512xf32, #tpu.memory_space<vmem>>, %arg4: memref<128x128xf32, #tpu.memory_space<vmem>>, %arg5: memref<128x128xf32, #tpu.memory_space<vmem>>, %arg6: memref<128x128xf32, #tpu.memory_space<vmem>>, %arg7: memref<1x128xf32, #tpu.memory_space<vmem>>, %arg8: memref<64x128xf32, #tpu.memory_space<vmem>>, %arg9: memref<128x128xf32, #tpu.memory_space<vmem>>, %arg10: memref<128x128xf32, #tpu.memory_space<vmem>>, %arg11: memref<128x128xf32, #tpu.memory_space<vmem>>, %arg12: memref<1x128xf32, #tpu.memory_space<vmem>>, %arg13: memref<1x128xf32, #tpu.memory_space<vmem>>) attributes {dimension_semantics = [#tpu.dimension_semantics<arbitrary>], iteration_bounds = array<i64: 1>, scalar_prefetch = 0 : i64, scratch_operands = 3 : i64, tpu.core_type = #tpu.core_type<tc>, window_params = [{transform_indices = @transform_0, window_bounds = array<i64: 64, 32>}, {pipeline_mode = #tpu.pipeline_mode<synchronous>, transform_indices = @transform_1, window_bounds = array<i64: 32, 512>}, {pipeline_mode = #tpu.pipeline_mode<synchronous>, transform_indices = @transform_2, window_bounds = array<i64: 1, 512>}, {pipeline_mode = #tpu.pipeline_mode<synchronous>, transform_indices = @transform_3, window_bounds = array<i64: 128, 128>}, {pipeline_mode = #tpu.pipeline_mode<synchronous>, transform_indices = @transform_4, window_bounds = array<i64: 128, 128>}, {pipeline_mode = #tpu.pipeline_mode<synchronous>, transform_indices = @transform_5, window_bounds = array<i64: 128, 128>}, {pipeline_mode = #tpu.pipeline_mode<synchronous>, transform_indices = @transform_6, window_bounds = array<i64: 1, 128>}, {transform_indices = @transform_7, window_bounds = array<i64: 64, 128>}, {pipeline_mode = #tpu.pipeline_mode<synchronous>, transform_indices = @transform_8, window_bounds = array<i64: 128, 128>}, {pipeline_mode = #tpu.pipeline_mode<synchronous>, transform_indices = @transform_9, window_bounds = array<i64: 128, 128>}]} {
    %c0_i32 = arith.constant 0 : i32
    %0 = arith.cmpi eq, %arg0, %c0_i32 : i32
    %1 = arith.extui %0 : i1 to i32
    %c0_i32_0 = arith.constant 0 : i32
    %2 = arith.cmpi ne, %1, %c0_i32_0 : i32
    scf.if %2 {
      %cst_25 = arith.constant 0.000000e+00 : f32
      %33 = vector.broadcast %cst_25 : f32 to vector<128x128xf32>
      %c0_26 = arith.constant 0 : index
      %c0_27 = arith.constant 0 : index
      %34 = vector.load %arg11[%c0_26, %c0_27] : memref<128x128xf32, #tpu.memory_space<vmem>>, vector<128x128xf32>
      tpu.vector_store %arg11[%c0_26, %c0_27], %33 {strides = array<i32>} : memref<128x128xf32, #tpu.memory_space<vmem>>, vector<128x128xf32>,
      %cst_28 = arith.constant 0.000000e+00 : f32
      %35 = vector.broadcast %cst_28 : f32 to vector<1x128xf32>
      %c0_29 = arith.constant 0 : index
      %c0_30 = arith.constant 0 : index
      %36 = vector.load %arg12[%c0_29, %c0_30] : memref<1x128xf32, #tpu.memory_space<vmem>>, vector<1x128xf32>
      tpu.vector_store %arg12[%c0_29, %c0_30], %35 {strides = array<i32>} : memref<1x128xf32, #tpu.memory_space<vmem>>, vector<1x128xf32>,
      %cst_31 = arith.constant 0.000000e+00 : f32
      %37 = vector.broadcast %cst_31 : f32 to vector<1x128xf32>
      %c0_32 = arith.constant 0 : index
      %c0_33 = arith.constant 0 : index
      %38 = vector.load %arg13[%c0_32, %c0_33] : memref<1x128xf32, #tpu.memory_space<vmem>>, vector<1x128xf32>
      tpu.vector_store %arg13[%c0_32, %c0_33], %37 {strides = array<i32>} : memref<1x128xf32, #tpu.memory_space<vmem>>, vector<1x128xf32>,
    } else {
    }
    %c0 = arith.constant 0 : index
    %c0_1 = arith.constant 0 : index
    %3 = vector.load %arg1[%c0, %c0_1] : memref<64x32xf32, #tpu.memory_space<vmem>>, vector<64x32xf32>
    %c0_2 = arith.constant 0 : index
    %c0_3 = arith.constant 0 : index
    %4 = vector.load %arg2[%c0_2, %c0_3] : memref<32x512xf32, #tpu.memory_space<vmem>>, vector<32x512xf32>
    %cst = arith.constant dense<0.000000e+00> : vector<64x512xf32>
    %5 = tpu.matmul %3, %4, %cst {dimension_numbers = #tpu.dot_dimension_numbers<[1], [0], [0], [1], [0, 0, 1, 1], [], []>} : vector<64x32xf32>, vector<32x512xf32>, vector<64x512xf32> -> vector<64x512xf32>
    %c0_4 = arith.constant 0 : index
    %c0_5 = arith.constant 0 : index
    %6 = vector.load %arg3[%c0_4, %c0_5] : memref<1x512xf32, #tpu.memory_space<vmem>>, vector<1x512xf32>
    %7 = vector.broadcast %6 : vector<1x512xf32> to vector<64x512xf32>
    %8 = arith.addf %5, %7 : vector<64x512xf32>
    %9 = vector.extract_strided_slice %8 {offsets = [0, 0], sizes = [64, 128], strides = [1, 1]} : vector<64x512xf32> to vector<64x128xf32>
    %10 = vector.extract_strided_slice %8 {offsets = [0, 128], sizes = [64, 128], strides = [1, 1]} : vector<64x512xf32> to vector<64x128xf32>
    %11 = vector.extract_strided_slice %8 {offsets = [0, 256], sizes = [64, 128], strides = [1, 1]} : vector<64x512xf32> to vector<64x128xf32>
    %12 = vector.extract_strided_slice %8 {offsets = [0, 384], sizes = [64, 128], strides = [1, 1]} : vector<64x512xf32> to vector<64x128xf32>
    %c0_6 = arith.constant 0 : index
    %c0_7 = arith.constant 0 : index
    %13 = vector.load %arg8[%c0_6, %c0_7] : memref<64x128xf32, #tpu.memory_space<vmem>>, vector<64x128xf32>
    tpu.vector_store %arg8[%c0_6, %c0_7], %9 {strides = array<i32>} : memref<64x128xf32, #tpu.memory_space<vmem>>, vector<64x128xf32>,
    %c0_8 = arith.constant 0 : index
    %c0_9 = arith.constant 0 : index
    %14 = vector.load %arg11[%c0_8, %c0_9] : memref<128x128xf32, #tpu.memory_space<vmem>>, vector<128x128xf32>
    %cst_10 = arith.constant dense<0.000000e+00> : vector<128x128xf32>
    %15 = tpu.matmul %11, %10, %cst_10 {dimension_numbers = #tpu.dot_dimension_numbers<[0], [0], [1], [1], [0, 1, 1, 1], [], []>} : vector<64x128xf32>, vector<64x128xf32>, vector<128x128xf32> -> vector<128x128xf32>
    %16 = arith.addf %14, %15 : vector<128x128xf32>
    %c0_11 = arith.constant 0 : index
    %c0_12 = arith.constant 0 : index
    %17 = vector.load %arg11[%c0_11, %c0_12] : memref<128x128xf32, #tpu.memory_space<vmem>>, vector<128x128xf32>
    tpu.vector_store %arg11[%c0_11, %c0_12], %16 {strides = array<i32>} : memref<128x128xf32, #tpu.memory_space<vmem>>, vector<128x128xf32>,
    %c0_13 = arith.constant 0 : index
    %c0_14 = arith.constant 0 : index
    %18 = vector.load %arg12[%c0_13, %c0_14] : memref<1x128xf32, #tpu.memory_space<vmem>>, vector<1x128xf32>
    %19 = arith.mulf %11, %11 : vector<64x128xf32>
    %cst_15 = arith.constant dense<0.000000e+00> : vector<128xf32>
    %20 = vector.multi_reduction <add>, %19, %cst_15 [0] : vector<64x128xf32> to vector<128xf32>
    %21 = vector.shape_cast %20 : vector<128xf32> to vector<1x128xf32>
    %22 = arith.addf %18, %21 : vector<1x128xf32>
    %c0_16 = arith.constant 0 : index
    %c0_17 = arith.constant 0 : index
    %23 = vector.load %arg12[%c0_16, %c0_17] : memref<1x128xf32, #tpu.memory_space<vmem>>, vector<1x128xf32>
    tpu.vector_store %arg12[%c0_16, %c0_17], %22 {strides = array<i32>} : memref<1x128xf32, #tpu.memory_space<vmem>>, vector<1x128xf32>,
    %c0_18 = arith.constant 0 : index
    %c0_19 = arith.constant 0 : index
    %24 = vector.load %arg13[%c0_18, %c0_19] : memref<1x128xf32, #tpu.memory_space<vmem>>, vector<1x128xf32>
    %25 = arith.mulf %12, %12 : vector<64x128xf32>
    %cst_20 = arith.constant dense<0.000000e+00> : vector<128xf32>
    %26 = vector.multi_reduction <add>, %25, %cst_20 [0] : vector<64x128xf32> to vector<128xf32>
    %27 = vector.shape_cast %26 : vector<128xf32> to vector<1x128xf32>
    %28 = arith.addf %24, %27 : vector<1x128xf32>
    %c0_21 = arith.constant 0 : index
    %c0_22 = arith.constant 0 : index
    %29 = vector.load %arg13[%c0_21, %c0_22] : memref<1x128xf32, #tpu.memory_space<vmem>>, vector<1x128xf32>
    tpu.vector_store %arg13[%c0_21, %c0_22], %28 {strides = array<i32>} : memref<1x128xf32, #tpu.memory_space<vmem>>, vector<1x128xf32>,
    %c0_i32_23 = arith.constant 0 : i32
    %30 = arith.cmpi eq, %arg0, %c0_i32_23 : i32
    %31 = arith.extui %30 : i1 to i32
    %c0_i32_24 = arith.constant 0 : i32
    %32 = arith.cmpi ne, %31, %c0_i32_24 : i32
    scf.if %32 {
      %c0_25 = arith.constant 0 : index
      %c0_26 = arith.constant 0 : index
      %33 = vector.load %arg7[%c0_25, %c0_26] : memref<1x128xf32, #tpu.memory_space<vmem>>, vector<1x128xf32>
      %c0_27 = arith.constant 0 : index
      %c0_28 = arith.constant 0 : index
      %34 = vector.load %arg12[%c0_27, %c0_28] : memref<1x128xf32, #tpu.memory_space<vmem>>, vector<1x128xf32>
      %35 = arith.mulf %34, %33 : vector<1x128xf32>
      %36 = vector.shape_cast %35 : vector<1x128xf32> to vector<1x1x128xf32>
      %cst_29 = arith.constant dense<0.000000e+00> : vector<1xf32>
      %37 = vector.multi_reduction <add>, %36, %cst_29 [1, 2] : vector<1x1x128xf32> to vector<1xf32>
      %38 = vector.shape_cast %37 : vector<1xf32> to vector<1x1x1xf32>
      %39 = vector.extract %38[0, 0, 0] : f32 from vector<1x1x1xf32>
      %c0_30 = arith.constant 0 : index
      %c0_31 = arith.constant 0 : index
      %40 = vector.load %arg13[%c0_30, %c0_31] : memref<1x128xf32, #tpu.memory_space<vmem>>, vector<1x128xf32>
      %41 = arith.mulf %40, %33 : vector<1x128xf32>
      %42 = vector.shape_cast %41 : vector<1x128xf32> to vector<1x1x128xf32>
      %cst_32 = arith.constant dense<0.000000e+00> : vector<1xf32>
      %43 = vector.multi_reduction <add>, %42, %cst_32 [1, 2] : vector<1x1x128xf32> to vector<1xf32>
      %44 = vector.shape_cast %43 : vector<1xf32> to vector<1x1x1xf32>
      %45 = vector.extract %44[0, 0, 0] : f32 from vector<1x1x1xf32>
      %46 = arith.mulf %39, %45 : f32
      %47 = math.rsqrt %46 : f32
      %48 = tpu.iota {dimensions = array<i32: 0>} : vector<128x1xi32>
      %c0_i32_33 = arith.constant 0 : i32
      %49 = vector.broadcast %c0_i32_33 : i32 to vector<128x1xi32>
      %50 = arith.cmpi eq, %48, %49 : vector<128x1xi32>
      %cst_34 = arith.constant 1.000000e+00 : f32
      %51 = vector.broadcast %cst_34 : f32 to vector<128x1xf32>
      %52 = vector.broadcast %47 : f32 to vector<128x1xf32>
      %53 = arith.select %50, %51, %52 : vector<128x1xi1>, vector<128x1xf32>
      %c0_35 = arith.constant 0 : index
      %c0_36 = arith.constant 0 : index
      %54 = vector.load %arg4[%c0_35, %c0_36] : memref<128x128xf32, #tpu.memory_space<vmem>>, vector<128x128xf32>
      %55 = vector.broadcast %53 : vector<128x1xf32> to vector<128x128xf32>
      %56 = arith.mulf %54, %55 : vector<128x128xf32>
      %c0_37 = arith.constant 0 : index
      %c0_38 = arith.constant 0 : index
      %57 = vector.load %arg11[%c0_37, %c0_38] : memref<128x128xf32, #tpu.memory_space<vmem>>, vector<128x128xf32>
      %c0_39 = arith.constant 0 : index
      %c0_40 = arith.constant 0 : index
      %58 = vector.load %arg5[%c0_39, %c0_40] : memref<128x128xf32, #tpu.memory_space<vmem>>, vector<128x128xf32>
      %cst_41 = arith.constant dense<0.000000e+00> : vector<128x128xf32>
      %59 = tpu.matmul %57, %58, %cst_41 {dimension_numbers = #tpu.dot_dimension_numbers<[1], [0], [0], [1], [0, 0, 1, 1], [], []>} : vector<128x128xf32>, vector<128x128xf32>, vector<128x128xf32> -> vector<128x128xf32>
      %60 = arith.mulf %59, %56 : vector<128x128xf32>
      %c0_42 = arith.constant 0 : index
      %c0_43 = arith.constant 0 : index
      %61 = vector.load %arg9[%c0_42, %c0_43] : memref<128x128xf32, #tpu.memory_space<vmem>>, vector<128x128xf32>
      tpu.vector_store %arg9[%c0_42, %c0_43], %60 {strides = array<i32>} : memref<128x128xf32, #tpu.memory_space<vmem>>, vector<128x128xf32>,
      %c0_44 = arith.constant 0 : index
      %c0_45 = arith.constant 0 : index
      %62 = vector.load %arg6[%c0_44, %c0_45] : memref<128x128xf32, #tpu.memory_space<vmem>>, vector<128x128xf32>
      %cst_46 = arith.constant dense<0.000000e+00> : vector<128x128xf32>
      %63 = tpu.matmul %57, %62, %cst_46 {dimension_numbers = #tpu.dot_dimension_numbers<[1], [0], [0], [1], [0, 0, 1, 1], [], []>} : vector<128x128xf32>, vector<128x128xf32>, vector<128x128xf32> -> vector<128x128xf32>
      %64 = arith.mulf %63, %56 : vector<128x128xf32>
      %c0_47 = arith.constant 0 : index
      %c0_48 = arith.constant 0 : index
      %65 = vector.load %arg10[%c0_47, %c0_48] : memref<128x128xf32, #tpu.memory_space<vmem>>, vector<128x128xf32>
      tpu.vector_store %arg10[%c0_47, %c0_48], %64 {strides = array<i32>} : memref<128x128xf32, #tpu.memory_space<vmem>>, vector<128x128xf32>,
    } else {
    }
    return
  }
  func.func @transform_0(%arg0: i32) -> (i32, i32) {
    %c0_i32 = arith.constant 0 : i32
    %c0_i32_0 = arith.constant 0 : i32
    return %arg0, %c0_i32 : i32, i32
  }
  func.func @transform_1(%arg0: i32) -> (i32, i32) {
    %c0_i32 = arith.constant 0 : i32
    %c0_i32_0 = arith.constant 0 : i32
    %c0_i32_1 = arith.constant 0 : i32
    return %c0_i32, %c0_i32_0 : i32, i32
  }
  func.func @transform_2(%arg0: i32) -> (i32, i32) {
    %c0_i32 = arith.constant 0 : i32
    %c0_i32_0 = arith.constant 0 : i32
    %c0_i32_1 = arith.constant 0 : i32
    return %c0_i32, %c0_i32_0 : i32, i32
  }
  func.func @transform_3(%arg0: i32) -> (i32, i32) {
    %c0_i32 = arith.constant 0 : i32
    %c0_i32_0 = arith.constant 0 : i32
    %c0_i32_1 = arith.constant 0 : i32
    return %c0_i32, %c0_i32_0 : i32, i32
  }
  func.func @transform_4(%arg0: i32) -> (i32, i32) {
    %c0_i32 = arith.constant 0 : i32
    %c0_i32_0 = arith.constant 0 : i32
    %c0_i32_1 = arith.constant 0 : i32
    return %c0_i32, %c0_i32_0 : i32, i32
  }
  func.func @transform_5(%arg0: i32) -> (i32, i32) {
    %c0_i32 = arith.constant 0 : i32
    %c0_i32_0 = arith.constant 0 : i32
    %c0_i32_1 = arith.constant 0 : i32
    return %c0_i32, %c0_i32_0 : i32, i32
  }
  func.func @transform_6(%arg0: i32) -> (i32, i32) {
    %c0_i32 = arith.constant 0 : i32
    %c0_i32_0 = arith.constant 0 : i32
    %c0_i32_1 = arith.constant 0 : i32
    return %c0_i32, %c0_i32_0 : i32, i32
  }
  func.func @transform_7(%arg0: i32) -> (i32, i32) {
    %c0_i32 = arith.constant 0 : i32
    %c0_i32_0 = arith.constant 0 : i32
    return %arg0, %c0_i32 : i32, i32
  }
  func.func @transform_8(%arg0: i32) -> (i32, i32) {
    %c0_i32 = arith.constant 0 : i32
    %c0_i32_0 = arith.constant 0 : i32
    %c0_i32_1 = arith.constant 0 : i32
    return %c0_i32, %c0_i32_0 : i32, i32
  }
  func.func @transform_9(%arg0: i32) -> (i32, i32) {
    %c0_i32 = arith.constant 0 : i32
    %c0_i32_0 = arith.constant 0 : i32
    %c0_i32_1 = arith.constant 0 : i32
    return %c0_i32, %c0_i32_0 : i32, i32
  }
}

module attributes {stable_mosaic.version = 11 : i64} {
  func.func @tile_kernel(%arg0: i32, %arg1: memref<64x32xf32, #tpu.memory_space<vmem>>, %arg2: memref<64x32xf32, #tpu.memory_space<vmem>>, %arg3: memref<32x128xf32, #tpu.memory_space<vmem>>, %arg4: memref<1x128xf32, #tpu.memory_space<vmem>>, %arg5: memref<128x128xf32, #tpu.memory_space<vmem>>, %arg6: memref<128x128xf32, #tpu.memory_space<vmem>>, %arg7: memref<64x128xf32, #tpu.memory_space<vmem>>, %arg8: memref<64x64xf32, #tpu.memory_space<vmem>>, %arg9: memref<128x128xf32, #tpu.memory_space<vmem>>, %arg10: memref<32x128xf32, #tpu.memory_space<vmem>>, %arg11: memref<1x128xf32, #tpu.memory_space<vmem>>, %arg12: memref<1x128xf32, #tpu.memory_space<vmem>>, %arg13: memref<64x128xf32, #tpu.memory_space<vmem>>) attributes {dimension_semantics = [#tpu.dimension_semantics<parallel>], iteration_bounds = array<i64: 1>, scalar_prefetch = 0 : i64, scratch_operands = 0 : i64, tpu.core_type = #tpu.core_type<tc>, window_params = [{transform_indices = @transform_0, window_bounds = array<i64: 64, 32>}, {transform_indices = @transform_1, window_bounds = array<i64: 64, 32>}, {pipeline_mode = #tpu.pipeline_mode<synchronous>, transform_indices = @transform_2, window_bounds = array<i64: 32, 128>}, {pipeline_mode = #tpu.pipeline_mode<synchronous>, transform_indices = @transform_3, window_bounds = array<i64: 1, 128>}, {pipeline_mode = #tpu.pipeline_mode<synchronous>, transform_indices = @transform_4, window_bounds = array<i64: 128, 128>}, {pipeline_mode = #tpu.pipeline_mode<synchronous>, transform_indices = @transform_5, window_bounds = array<i64: 128, 128>}, {pipeline_mode = #tpu.pipeline_mode<synchronous>, transform_indices = @transform_6, window_bounds = array<i64: 64, 128>}, {transform_indices = @transform_7, window_bounds = array<i64: 64, 64>}, {pipeline_mode = #tpu.pipeline_mode<synchronous>, transform_indices = @transform_8, window_bounds = array<i64: 128, 128>}, {pipeline_mode = #tpu.pipeline_mode<synchronous>, transform_indices = @transform_9, window_bounds = array<i64: 32, 128>}, {pipeline_mode = #tpu.pipeline_mode<synchronous>, transform_indices = @transform_10, window_bounds = array<i64: 1, 128>}, {pipeline_mode = #tpu.pipeline_mode<synchronous>, transform_indices = @transform_11, window_bounds = array<i64: 1, 128>}, {transform_indices = @transform_12, window_bounds = array<i64: 64, 128>}]} {
    %c0 = arith.constant 0 : index
    %c0_0 = arith.constant 0 : index
    %0 = vector.load %arg1[%c0, %c0_0] : memref<64x32xf32, #tpu.memory_space<vmem>>, vector<64x32xf32>
    %c0_1 = arith.constant 0 : index
    %c0_2 = arith.constant 0 : index
    %1 = vector.load %arg3[%c0_1, %c0_2] : memref<32x128xf32, #tpu.memory_space<vmem>>, vector<32x128xf32>
    %cst = arith.constant dense<0.000000e+00> : vector<64x128xf32>
    %2 = tpu.matmul %0, %1, %cst {dimension_numbers = #tpu.dot_dimension_numbers<[1], [0], [0], [1], [0, 0, 1, 1], [], []>} : vector<64x32xf32>, vector<32x128xf32>, vector<64x128xf32> -> vector<64x128xf32>
    %c0_3 = arith.constant 0 : index
    %c0_4 = arith.constant 0 : index
    %3 = vector.load %arg4[%c0_3, %c0_4] : memref<1x128xf32, #tpu.memory_space<vmem>>, vector<1x128xf32>
    %4 = vector.broadcast %3 : vector<1x128xf32> to vector<64x128xf32>
    %5 = arith.addf %2, %4 : vector<64x128xf32>
    %c0_5 = arith.constant 0 : index
    %c0_6 = arith.constant 0 : index
    %6 = vector.load %arg5[%c0_5, %c0_6] : memref<128x128xf32, #tpu.memory_space<vmem>>, vector<128x128xf32>
    %cst_7 = arith.constant dense<0.000000e+00> : vector<64x128xf32>
    %7 = tpu.matmul %5, %6, %cst_7 {dimension_numbers = #tpu.dot_dimension_numbers<[1], [0], [0], [1], [0, 0, 1, 1], [], []>} : vector<64x128xf32>, vector<128x128xf32>, vector<64x128xf32> -> vector<64x128xf32>
    %c0_8 = arith.constant 0 : index
    %c0_9 = arith.constant 0 : index
    %8 = vector.load %arg6[%c0_8, %c0_9] : memref<128x128xf32, #tpu.memory_space<vmem>>, vector<128x128xf32>
    %cst_10 = arith.constant dense<0.000000e+00> : vector<64x128xf32>
    %9 = tpu.matmul %5, %8, %cst_10 {dimension_numbers = #tpu.dot_dimension_numbers<[1], [0], [0], [1], [0, 0, 1, 1], [], []>} : vector<64x128xf32>, vector<128x128xf32>, vector<64x128xf32> -> vector<64x128xf32>
    %10 = tpu.reciprocal %9 {approx = true} : vector<64x128xf32> -> vector<64x128xf32>
    %11 = arith.mulf %9, %10 : vector<64x128xf32>
    %cst_11 = arith.constant 2.000000e+00 : f32
    %12 = vector.broadcast %cst_11 : f32 to vector<64x128xf32>
    %13 = arith.subf %12, %11 : vector<64x128xf32>
    %14 = arith.mulf %10, %13 : vector<64x128xf32>
    %15 = arith.mulf %7, %14 : vector<64x128xf32>
    %c0_12 = arith.constant 0 : index
    %c0_13 = arith.constant 0 : index
    %16 = vector.load %arg8[%c0_12, %c0_13] : memref<64x64xf32, #tpu.memory_space<vmem>>, vector<64x64xf32>
    %c0_14 = arith.constant 0 : index
    %c0_15 = arith.constant 0 : index
    %17 = vector.load %arg7[%c0_14, %c0_15] : memref<64x128xf32, #tpu.memory_space<vmem>>, vector<64x128xf32>
    %cst_16 = arith.constant dense<0.000000e+00> : vector<64x128xf32>
    %18 = tpu.matmul %16, %17, %cst_16 {dimension_numbers = #tpu.dot_dimension_numbers<[1], [0], [0], [1], [0, 0, 1, 1], [], []>} : vector<64x64xf32>, vector<64x128xf32>, vector<64x128xf32> -> vector<64x128xf32>
    %cst_17 = arith.constant 5.000000e-01 : f32
    %19 = vector.broadcast %cst_17 : f32 to vector<64x128xf32>
    %20 = arith.mulf %19, %15 : vector<64x128xf32>
    %cst_18 = arith.constant 5.000000e-01 : f32
    %21 = vector.broadcast %cst_18 : f32 to vector<64x128xf32>
    %22 = arith.mulf %21, %18 : vector<64x128xf32>
    %23 = arith.addf %20, %22 : vector<64x128xf32>
    %c0_19 = arith.constant 0 : index
    %c0_20 = arith.constant 0 : index
    %24 = vector.load %arg2[%c0_19, %c0_20] : memref<64x32xf32, #tpu.memory_space<vmem>>, vector<64x32xf32>
    %cst_21 = arith.constant 5.000000e-01 : f32
    %25 = vector.broadcast %cst_21 : f32 to vector<64x32xf32>
    %26 = arith.mulf %24, %25 : vector<64x32xf32>
    %c0_22 = arith.constant 0 : index
    %c0_23 = arith.constant 0 : index
    %27 = vector.load %arg1[%c0_22, %c0_23] : memref<64x32xf32, #tpu.memory_space<vmem>>, vector<64x32xf32>
    %cst_24 = arith.constant 5.000000e-01 : f32
    %28 = vector.broadcast %cst_24 : f32 to vector<64x32xf32>
    %29 = arith.mulf %27, %28 : vector<64x32xf32>
    %30 = arith.addf %26, %29 : vector<64x32xf32>
    %c0_25 = arith.constant 0 : index
    %c0_26 = arith.constant 0 : index
    %31 = vector.load %arg9[%c0_25, %c0_26] : memref<128x128xf32, #tpu.memory_space<vmem>>, vector<128x128xf32>
    %cst_27 = arith.constant dense<0.000000e+00> : vector<64x128xf32>
    %32 = tpu.matmul %23, %31, %cst_27 {dimension_numbers = #tpu.dot_dimension_numbers<[1], [0], [0], [1], [0, 0, 1, 1], [], []>} : vector<64x128xf32>, vector<128x128xf32>, vector<64x128xf32> -> vector<64x128xf32>
    %c0_28 = arith.constant 0 : index
    %c0_29 = arith.constant 0 : index
    %33 = vector.load %arg10[%c0_28, %c0_29] : memref<32x128xf32, #tpu.memory_space<vmem>>, vector<32x128xf32>
    %cst_30 = arith.constant dense<0.000000e+00> : vector<64x128xf32>
    %34 = tpu.matmul %30, %33, %cst_30 {dimension_numbers = #tpu.dot_dimension_numbers<[1], [0], [0], [1], [0, 0, 1, 1], [], []>} : vector<64x32xf32>, vector<32x128xf32>, vector<64x128xf32> -> vector<64x128xf32>
    %35 = arith.addf %32, %34 : vector<64x128xf32>
    %cst_31 = arith.constant dense<0.000000e+00> : vector<64xf32>
    %36 = vector.multi_reduction <add>, %35, %cst_31 [1] : vector<64x128xf32> to vector<64xf32>
    %37 = vector.shape_cast %36 : vector<64xf32> to vector<64x1xf32>
    %cst_32 = arith.constant 1.280000e+02 : f32
    %38 = vector.broadcast %cst_32 : f32 to vector<64x1xf32>
    %39 = arith.divf %37, %38 : vector<64x1xf32>
    %40 = vector.broadcast %39 : vector<64x1xf32> to vector<64x128xf32>
    %41 = arith.subf %35, %40 : vector<64x128xf32>
    %42 = arith.mulf %41, %41 : vector<64x128xf32>
    %cst_33 = arith.constant dense<0.000000e+00> : vector<64xf32>
    %43 = vector.multi_reduction <add>, %42, %cst_33 [1] : vector<64x128xf32> to vector<64xf32>
    %44 = vector.shape_cast %43 : vector<64xf32> to vector<64x1xf32>
    %cst_34 = arith.constant 1.280000e+02 : f32
    %45 = vector.broadcast %cst_34 : f32 to vector<64x1xf32>
    %46 = arith.divf %44, %45 : vector<64x1xf32>
    %cst_35 = arith.constant 9.99999974E-6 : f32
    %47 = vector.broadcast %cst_35 : f32 to vector<64x1xf32>
    %48 = arith.addf %46, %47 : vector<64x1xf32>
    %49 = math.rsqrt %48 : vector<64x1xf32>
    %50 = vector.broadcast %49 : vector<64x1xf32> to vector<64x128xf32>
    %51 = arith.mulf %41, %50 : vector<64x128xf32>
    %c0_36 = arith.constant 0 : index
    %c0_37 = arith.constant 0 : index
    %52 = vector.load %arg11[%c0_36, %c0_37] : memref<1x128xf32, #tpu.memory_space<vmem>>, vector<1x128xf32>
    %53 = vector.broadcast %52 : vector<1x128xf32> to vector<64x128xf32>
    %54 = arith.mulf %51, %53 : vector<64x128xf32>
    %c0_38 = arith.constant 0 : index
    %c0_39 = arith.constant 0 : index
    %55 = vector.load %arg12[%c0_38, %c0_39] : memref<1x128xf32, #tpu.memory_space<vmem>>, vector<1x128xf32>
    %56 = vector.broadcast %55 : vector<1x128xf32> to vector<64x128xf32>
    %57 = arith.addf %54, %56 : vector<64x128xf32>
    %c0_40 = arith.constant 0 : index
    %c0_41 = arith.constant 0 : index
    %58 = vector.load %arg13[%c0_40, %c0_41] : memref<64x128xf32, #tpu.memory_space<vmem>>, vector<64x128xf32>
    tpu.vector_store %arg13[%c0_40, %c0_41], %57 {strides = array<i32>} : memref<64x128xf32, #tpu.memory_space<vmem>>, vector<64x128xf32>,
    return
  }
  func.func @transform_0(%arg0: i32) -> (i32, i32) {
    %c0_i32 = arith.constant 0 : i32
    %c0_i32_0 = arith.constant 0 : i32
    return %arg0, %c0_i32 : i32, i32
  }
  func.func @transform_1(%arg0: i32) -> (i32, i32) {
    %c0_i32 = arith.constant 0 : i32
    %c0_i32_0 = arith.constant 0 : i32
    return %arg0, %c0_i32 : i32, i32
  }
  func.func @transform_2(%arg0: i32) -> (i32, i32) {
    %c0_i32 = arith.constant 0 : i32
    %c0_i32_0 = arith.constant 0 : i32
    %c0_i32_1 = arith.constant 0 : i32
    return %c0_i32, %c0_i32_0 : i32, i32
  }
  func.func @transform_3(%arg0: i32) -> (i32, i32) {
    %c0_i32 = arith.constant 0 : i32
    %c0_i32_0 = arith.constant 0 : i32
    %c0_i32_1 = arith.constant 0 : i32
    return %c0_i32, %c0_i32_0 : i32, i32
  }
  func.func @transform_4(%arg0: i32) -> (i32, i32) {
    %c0_i32 = arith.constant 0 : i32
    %c0_i32_0 = arith.constant 0 : i32
    %c0_i32_1 = arith.constant 0 : i32
    return %c0_i32, %c0_i32_0 : i32, i32
  }
  func.func @transform_5(%arg0: i32) -> (i32, i32) {
    %c0_i32 = arith.constant 0 : i32
    %c0_i32_0 = arith.constant 0 : i32
    %c0_i32_1 = arith.constant 0 : i32
    return %c0_i32, %c0_i32_0 : i32, i32
  }
  func.func @transform_6(%arg0: i32) -> (i32, i32) {
    %c0_i32 = arith.constant 0 : i32
    %c0_i32_0 = arith.constant 0 : i32
    %c0_i32_1 = arith.constant 0 : i32
    return %c0_i32, %c0_i32_0 : i32, i32
  }
  func.func @transform_7(%arg0: i32) -> (i32, i32) {
    %c0_i32 = arith.constant 0 : i32
    %c0_i32_0 = arith.constant 0 : i32
    return %arg0, %c0_i32 : i32, i32
  }
  func.func @transform_8(%arg0: i32) -> (i32, i32) {
    %c0_i32 = arith.constant 0 : i32
    %c0_i32_0 = arith.constant 0 : i32
    %c0_i32_1 = arith.constant 0 : i32
    return %c0_i32, %c0_i32_0 : i32, i32
  }
  func.func @transform_9(%arg0: i32) -> (i32, i32) {
    %c0_i32 = arith.constant 0 : i32
    %c0_i32_0 = arith.constant 0 : i32
    %c0_i32_1 = arith.constant 0 : i32
    return %c0_i32, %c0_i32_0 : i32, i32
  }
  func.func @transform_10(%arg0: i32) -> (i32, i32) {
    %c0_i32 = arith.constant 0 : i32
    %c0_i32_0 = arith.constant 0 : i32
    %c0_i32_1 = arith.constant 0 : i32
    return %c0_i32, %c0_i32_0 : i32, i32
  }
  func.func @transform_11(%arg0: i32) -> (i32, i32) {
    %c0_i32 = arith.constant 0 : i32
    %c0_i32_0 = arith.constant 0 : i32
    %c0_i32_1 = arith.constant 0 : i32
    return %c0_i32, %c0_i32_0 : i32, i32
  }
  func.func @transform_12(%arg0: i32) -> (i32, i32) {
    %c0_i32 = arith.constant 0 : i32
    %c0_i32_0 = arith.constant 0 : i32
    return %arg0, %c0_i32 : i32, i32
  }
}

</mosaic_0001>

<llo_original>
// kernel: difformer_forward.2
$region0: #{difformer_forward.2}
  #allocation0 [shape = 'u32[]', space=smem, size = 0x4, offset = 0x4, fixed_abs, tag = 'smem constant byte address 0x4 - core index']
  #allocation1 [shape = 'u32[144,128]{1,0:T(1,128)}', space=vmem, size = 0x12000, scoped, tag = 'internal scratch']
  #allocation2 [shape = 'f32[128,128]{1,0:T(8,128)}', space=vmem, size = 0x10000, scoped, tag = 'scratch operand']
  #allocation3 [shape = 'f32[1,128]{1,0:T(1,128)}', space=vmem, size = 0x200, scoped, tag = 'scratch operand']
  #allocation4 [shape = 'f32[1,128]{1,0:T(1,128)}', space=vmem, size = 0x200, scoped, tag = 'scratch operand']
  %s0 = inlined_call_operand.vmem [shape: f32[64,32], index: 0, kind: input, shape index: {}]
  %s1 = inlined_call_operand.vmem [shape: f32[32,512], index: 1, kind: input, shape index: {}]
  %s2 = inlined_call_operand.vmem [shape: f32[1,512], index: 2, kind: input, shape index: {}]
  %s3 = inlined_call_operand.vmem [shape: f32[128,128], index: 3, kind: input, shape index: {}]
  %s4 = inlined_call_operand.vmem [shape: f32[128,128], index: 4, kind: input, shape index: {}]
  %s5 = inlined_call_operand.vmem [shape: f32[128,128], index: 5, kind: input, shape index: {}]
  %s6 = inlined_call_operand.vmem [shape: f32[1,128], index: 6, kind: input, shape index: {}]
  %s7 = inlined_call_operand.vmem [shape: f32[64,128], index: 7, kind: output, shape index: {0}]
  %s8 = inlined_call_operand.vmem [shape: f32[128,128], index: 8, kind: output, shape index: {1}]
  %s9 = inlined_call_operand.vmem [shape: f32[128,128], index: 9, kind: output, shape index: {2}]
  %10 = xla_tuple %s7, %s8, %s9
  %s11 = sld [smem:[#allocation0]]
  $region62: #{difformer_forward.2} parent=0
    _
  %s13 = ssub.s32 1, %s11
  %s14 = scalar_select 0, %s13, %s11
  // Predicated region
  $region2: #{difformer_forward.2} parent=0 // pred_check
    _
  $region3: #{difformer_forward.2} parent=0 // pred_check_branch
    %16 = sbr.rel (0) target = $region5
  $region4: #{difformer_forward.2} parent=0 // pred_region
    _
  $region5: #{difformer_forward.2} parent=0 // pred_fallthru
    _
  // Predicated region
  $region6: #{difformer_forward.2} parent=0 // pred_check
    _
  $region7: #{difformer_forward.2} parent=0 // pred_check_branch
    %18 = sbr.rel (0) target = $region9
  $region8: #{difformer_forward.2} parent=0 // pred_region
    _
  $region9: #{difformer_forward.2} parent=0 // pred_fallthru
    _
  // Predicated region
  $region10: #{difformer_forward.2} parent=0 // pred_check
    _
  $region11: #{difformer_forward.2} parent=0 // pred_check_branch
    %20 = sbr.rel (0) target = $region13
  $region12: #{difformer_forward.2} parent=0 // pred_region
    _
  $region13: #{difformer_forward.2} parent=0 // pred_fallthru
    _
  // Predicated region
  $region14: #{difformer_forward.2} parent=0 // pred_check
    _
  $region15: #{difformer_forward.2} parent=0 // pred_check_branch
    %22 = sbr.rel (0) target = $region17
  $region16: #{difformer_forward.2} parent=0 // pred_region
    _
  $region17: #{difformer_forward.2} parent=0 // pred_fallthru
    _
  // Predicated region
  $region18: #{difformer_forward.2} parent=0 // pred_check
    _
  $region19: #{difformer_forward.2} parent=0 // pred_check_branch
    %24 = sbr.rel (0) target = $region21
  $region20: #{difformer_forward.2} parent=0 // pred_region
    _
  $region21: #{difformer_forward.2} parent=0 // pred_fallthru
    _
  // Predicated region
  $region22: #{difformer_forward.2} parent=0 // pred_check
    _
  $region23: #{difformer_forward.2} parent=0 // pred_check_branch
    %26 = sbr.rel (0) target = $region25
  $region24: #{difformer_forward.2} parent=0 // pred_region
    _
  $region25: #{difformer_forward.2} parent=0 // pred_fallthru
    _
  // Predicated region
  $region26: #{difformer_forward.2} parent=0 // pred_check
    _
  $region27: #{difformer_forward.2} parent=0 // pred_check_branch
    %28 = sbr.rel (0) target = $region29
  $region28: #{difformer_forward.2} parent=0 // pred_region
    _
  $region29: #{difformer_forward.2} parent=0 // pred_fallthru
    _
  %p29 = scmp.eq.s32.totalorder 0, 0
  // Predicated region
  $region30: #{difformer_forward.2} parent=0 // pred_check
    %p30 = pneg %p29
  $region31: #{difformer_forward.2} parent=0 // pred_check_branch
    %32 = sbr.rel (%p30) target = $region33
  $region32: #{difformer_forward.2} parent=0 // pred_region
    %33 = vst [vmem:[#allocation2] sm:$0xff] 0.0
    %34 = vst [vmem:[#allocation2 + $0x8] sm:$0xff] 0.0
    %35 = vst [vmem:[#allocation2 + $0x10] sm:$0xff] 0.0
    %36 = vst [vmem:[#allocation2 + $0x18] sm:$0xff] 0.0
    %37 = vst [vmem:[#allocation2 + $0x20] sm:$0xff] 0.0
    %38 = vst [vmem:[#allocation2 + $0x28] sm:$0xff] 0.0
    %39 = vst [vmem:[#allocation2 + $0x30] sm:$0xff] 0.0
    %40 = vst [vmem:[#allocation2 + $0x38] sm:$0xff] 0.0
    %41 = vst [vmem:[#allocation2 + $0x40] sm:$0xff] 0.0
    %42 = vst [vmem:[#allocation2 + $0x48] sm:$0xff] 0.0
    %43 = vst [vmem:[#allocation2 + $0x50] sm:$0xff] 0.0
    %44 = vst [vmem:[#allocation2 + $0x58] sm:$0xff] 0.0
    %45 = vst [vmem:[#allocation2 + $0x60] sm:$0xff] 0.0
    %46 = vst [vmem:[#allocation2 + $0x68] sm:$0xff] 0.0
    %47 = vst [vmem:[#allocation2 + $0x70] sm:$0xff] 0.0
    %48 = vst [vmem:[#allocation2 + $0x78] sm:$0xff] 0.0
    %49 = vst [vmem:[#allocation3] sm:$0x1] 0.0
    %50 = vst [vmem:[#allocation4] sm:$0x1] 0.0
  $region33: #{difformer_forward.2} parent=0 // pred_fallthru
    _
  %v51 = vld [vmem:[%s0] sm:$0xff]
  %v52 = vld [vmem:[%s0 + $0x8] sm:$0xff]
  %v53 = vld [vmem:[%s0 + $0x10] sm:$0xff]
  %v54 = vld [vmem:[%s0 + $0x18] sm:$0xff]
  %v55 = vld [vmem:[%s0 + $0x20] sm:$0xff]
  %v56 = vld [vmem:[%s0 + $0x28] sm:$0xff]
  %v57 = vld [vmem:[%s0 + $0x30] sm:$0xff]
  %v58 = vld [vmem:[%s0 + $0x38] sm:$0xff]
  %v59 = vld [vmem:[%s1] sm:$0xff]
  %v60 = vld [vmem:[%s1 + $0x8] sm:$0xff]
  %v61 = vld [vmem:[%s1 + $0x10] sm:$0xff]
  %v62 = vld [vmem:[%s1 + $0x18] sm:$0xff]
  %v63 = vld [vmem:[%s1 + $0x20] sm:$0xff]
  %v64 = vld [vmem:[%s1 + $0x28] sm:$0xff]
  %v65 = vld [vmem:[%s1 + $0x30] sm:$0xff]
  %v66 = vld [vmem:[%s1 + $0x38] sm:$0xff]
  %v67 = vld [vmem:[%s1 + $0x40] sm:$0xff]
  %v68 = vld [vmem:[%s1 + $0x48] sm:$0xff]
  %v69 = vld [vmem:[%s1 + $0x50] sm:$0xff]
  %v70 = vld [vmem:[%s1 + $0x58] sm:$0xff]
  %v71 = vld [vmem:[%s1 + $0x60] sm:$0xff]
  %v72 = vld [vmem:[%s1 + $0x68] sm:$0xff]
  %v73 = vld [vmem:[%s1 + $0x70] sm:$0xff]
  %v74 = vld [vmem:[%s1 + $0x78] sm:$0xff]
  %v75 = vld [vmem:[%s2] sm:$0xf]
  %v77 = vlaneseq
  %v78 = vshrl.u32 %v77, 7
  %v79 = vsub.s32 0, %v78
  %v80 = vrot.slane %v75, %v79
  %v81 = vlaneseq
  %v82 = vshrl.u32 %v81, 7
  %v83 = vsub.s32 1, %v82
  %v84 = vrot.slane %v75, %v83
  %v85 = vlaneseq
  %v86 = vshrl.u32 %v85, 7
  %v87 = vsub.s32 2, %v86
  %v88 = vrot.slane %v75, %v87
  %v89 = vlaneseq
  %v90 = vshrl.u32 %v89, 7
  %v91 = vsub.s32 3, %v90
  %v92 = vrot.slane %v75, %v91
  %vm97 = vcmask 261120
  %v99 = vsel %vm97, %v51, 0
  %v102 = vsel %vm97, %v52, 0
  %v105 = vsel %vm97, %v53, 0
  %v108 = vsel %vm97, %v54, 0
  %v111 = vsel %vm97, %v55, 0
  %v114 = vsel %vm97, %v56, 0
  %v117 = vsel %vm97, %v57, 0
  %v120 = vsel %vm97, %v58, 0
  %122 = vmatprep.subr.mxu0 %v60
  %123 = vmatpush1.msra.mxu0 %v59
  %124 = vmatprep.subr.mxu0 %v64
  %125 = vmatpush1.msra.mxu0 %v63
  %126 = vmatprep.subr.mxu0 %v68
  %127 = vmatpush1.msra.mxu0 %v67
  %128 = vmatprep.subr.mxu0 %v72
  %129 = vmatpush1.msra.mxu0 %v71
  %130 = vmatprep.subr.mxu0 0.0
  %131 = vmatpush1.msra.mxu0 0.0
  %132 = vmatprep.subr.mxu0 0.0
  %133 = vmatpush1.msra.mxu0 0.0
  %134 = vmatprep.subr.mxu0 0.0
  %135 = vmatpush1.msra.mxu0 0.0
  %136 = vmatprep.subr.mxu0 0.0
  %137 = vmatpush1.msra.mxu0 0.0
  %138 = vmatprep.subr.mxu0 0.0
  %139 = vmatpush1.msra.mxu0 0.0
  %140 = vmatprep.subr.mxu0 0.0
  %141 = vmatpush1.msra.mxu0 0.0
  %142 = vmatprep.subr.mxu0 0.0
  %143 = vmatpush1.msra.mxu0 0.0
  %144 = vmatprep.subr.mxu0 0.0
  %145 = vmatpush1.msra.mxu0 0.0
  %146 = vmatprep.subr.mxu0 0.0
  %147 = vmatpush1.msra.mxu0 0.0
  %148 = vmatprep.subr.mxu0 0.0
  %149 = vmatpush1.msra.mxu0 0.0
  %150 = vmatprep.subr.mxu0 0.0
  %151 = vmatpush1.msra.mxu0 0.0
  %152 = vmatprep.subr.mxu0 0.0
  %153 = vmatpush1.msra.mxu0 0.0
  %154 = vmatprep.subr.mxu0 0.0
  %155 = vmatpush1.msra.mxu0 0.0
  %156 = vmatprep.subr.mxu0 0.0
  %157 = vmatpush1.msra.mxu0 0.0
  %158 = vmatprep.subr.mxu0 0.0
  %159 = vmatpush1.msra.mxu0 0.0
  %160 = vmatprep.subr.mxu0 0.0
  %161 = vmatpush1.msra.mxu0 0.0
  %162 = vmatprep.subr.mxu0 0.0
  %163 = vmatpush1.msra.mxu0 0.0
  %164 = vmatprep.subr.mxu0 0.0
  %165 = vmatpush1.msra.mxu0 0.0
  %166 = vmatprep.subr.mxu0 0.0
  %167 = vmatpush1.msra.mxu0 0.0
  %168 = vmatprep.subr.mxu0 0.0
  %169 = vmatpush1.msra.mxu0 0.0
  %170 = vmatprep.subr.mxu0 0.0
  %171 = vmatpush1.msra.mxu0 0.0
  %172 = vmatprep.subr.mxu0 0.0
  %173 = vmatpush1.msra.mxu0 0.0
  %174 = vmatprep.subr.mxu0 0.0
  %175 = vmatpush1.msra.mxu0 0.0
  %176 = vmatprep.subr.mxu0 0.0
  %177 = vmatpush1.msra.mxu0 0.0
  %178 = vmatprep.subr.mxu0 0.0
  %179 = vmatpush1.msra.mxu0 0.0
  %180 = vmatprep.subr.mxu0 0.0
  %181 = vmatpush1.msra.mxu0 0.0
  %182 = vmatprep.subr.mxu0 0.0
  %183 = vmatpush1.msra.mxu0 0.0
  %184 = vmatprep.subr.mxu0 0.0
  %185 = vmatpush1.msra.mxu0 0.0
  %186 = vmatprep.mubr.f32.mxu0 0.0
  %187 = vmatmul.mubr.f32.gmra.mrb[0].mxu0 %v99
  %v188 = vpop.f32.mrb[0].mxu0
  %v189 = vadd.f32 %v80, %v188
  %v190 = vpop.f32.mrb[0].mxu0
  %v191 = vadd.f32 %v84, %v190
  %192 = vmatprep.mubr.f32.mxu0 0.0
  %193 = vmatmul.mubr.f32.gmra.mrb[0].mxu0 %v102
  %v194 = vpop.f32.mrb[0].mxu0
  %v195 = vadd.f32 %v80, %v194
  %v196 = vpop.f32.mrb[0].mxu0
  %v197 = vadd.f32 %v84, %v196
  %198 = vmatprep.mubr.f32.mxu0 0.0
  %199 = vmatmul.mubr.f32.gmra.mrb[0].mxu0 %v105
  %v200 = vpop.f32.mrb[0].mxu0
  %v201 = vadd.f32 %v80, %v200
  %v202 = vpop.f32.mrb[0].mxu0
  %v203 = vadd.f32 %v84, %v202
  %204 = vmatprep.mubr.f32.mxu0 0.0
  %205 = vmatmul.mubr.f32.gmra.mrb[0].mxu0 %v108
  %v206 = vpop.f32.mrb[0].mxu0
  %v207 = vadd.f32 %v80, %v206
  %v208 = vpop.f32.mrb[0].mxu0
  %v209 = vadd.f32 %v84, %v208
  %210 = vmatprep.mubr.f32.mxu0 0.0
  %211 = vmatmul.mubr.f32.gmra.mrb[0].mxu0 %v111
  %v212 = vpop.f32.mrb[0].mxu0
  %v213 = vadd.f32 %v80, %v212
  %v214 = vpop.f32.mrb[0].mxu0
  %v215 = vadd.f32 %v84, %v214
  %216 = vmatprep.mubr.f32.mxu0 0.0
  %217 = vmatmul.mubr.f32.gmra.mrb[0].mxu0 %v114
  %v218 = vpop.f32.mrb[0].mxu0
  %v219 = vadd.f32 %v80, %v218
  %v220 = vpop.f32.mrb[0].mxu0
  %v221 = vadd.f32 %v84, %v220
  %222 = vmatprep.mubr.f32.mxu0 0.0
  %223 = vmatmul.mubr.f32.gmra.mrb[0].mxu0 %v117
  %v224 = vpop.f32.mrb[0].mxu0
  %v225 = vadd.f32 %v80, %v224
  %v226 = vpop.f32.mrb[0].mxu0
  %v227 = vadd.f32 %v84, %v226
  %228 = vmatprep.mubr.f32.mxu0 0.0
  %229 = vmatmul.mubr.f32.gmra.mrb[0].mxu0 %v120
  %v230 = vpop.f32.mrb[0].mxu0
  %v231 = vadd.f32 %v80, %v230
  %v232 = vpop.f32.mrb[0].mxu0
  %v233 = vadd.f32 %v84, %v232
  %234 = vdwg.mxu0
  %235 = vmatprep.subr.mxu0 %v62
  %236 = vmatpush1.msra.mxu0 %v61
  %237 = vmatprep.subr.mxu0 %v66
  %238 = vmatpush1.msra.mxu0 %v65
  %239 = vmatprep.subr.mxu0 %v70
  %240 = vmatpush1.msra.mxu0 %v69
  %241 = vmatprep.subr.mxu0 %v74
  %242 = vmatpush1.msra.mxu0 %v73
  %243 = vmatprep.subr.mxu0 0.0
  %244 = vmatpush1.msra.mxu0 0.0
  %245 = vmatprep.subr.mxu0 0.0
  %246 = vmatpush1.msra.mxu0 0.0
  %247 = vmatprep.subr.mxu0 0.0
  %248 = vmatpush1.msra.mxu0 0.0
  %249 = vmatprep.subr.mxu0 0.0
  %250 = vmatpush1.msra.mxu0 0.0
  %251 = vmatprep.subr.mxu0 0.0
  %252 = vmatpush1.msra.mxu0 0.0
  %253 = vmatprep.subr.mxu0 0.0
  %254 = vmatpush1.msra.mxu0 0.0
  %255 = vmatprep.subr.mxu0 0.0
  %256 = vmatpush1.msra.mxu0 0.0
  %257 = vmatprep.subr.mxu0 0.0
  %258 = vmatpush1.msra.mxu0 0.0
  %259 = vmatprep.subr.mxu0 0.0
  %260 = vmatpush1.msra.mxu0 0.0
  %261 = vmatprep.subr.mxu0 0.0
  %262 = vmatpush1.msra.mxu0 0.0
  %263 = vmatprep.subr.mxu0 0.0
  %264 = vmatpush1.msra.mxu0 0.0
  %265 = vmatprep.subr.mxu0 0.0
  %266 = vmatpush1.msra.mxu0 0.0
  %267 = vmatprep.subr.mxu0 0.0
  %268 = vmatpush1.msra.mxu0 0.0
  %269 = vmatprep.subr.mxu0 0.0
  %270 = vmatpush1.msra.mxu0 0.0
  %271 = vmatprep.subr.mxu0 0.0
  %272 = vmatpush1.msra.mxu0 0.0
  %273 = vmatprep.subr.mxu0 0.0
  %274 = vmatpush1.msra.mxu0 0.0
  %275 = vmatprep.subr.mxu0 0.0
  %276 = vmatpush1.msra.mxu0 0.0
  %277 = vmatprep.subr.mxu0 0.0
  %278 = vmatpush1.msra.mxu0 0.0
  %279 = vmatprep.subr.mxu0 0.0
  %280 = vmatpush1.msra.mxu0 0.0
  %281 = vmatprep.subr.mxu0 0.0
  %282 = vmatpush1.msra.mxu0 0.0
  %283 = vmatprep.subr.mxu0 0.0
  %284 = vmatpush1.msra.mxu0 0.0
  %285 = vmatprep.subr.mxu0 0.0
  %286 = vmatpush1.msra.mxu0 0.0
  %287 = vmatprep.subr.mxu0 0.0
  %288 = vmatpush1.msra.mxu0 0.0
  %289 = vmatprep.subr.mxu0 0.0
  %290 = vmatpush1.msra.mxu0 0.0
  %291 = vmatprep.subr.mxu0 0.0
  %292 = vmatpush1.msra.mxu0 0.0
  %293 = vmatprep.subr.mxu0 0.0
  %294 = vmatpush1.msra.mxu0 0.0
  %295 = vmatprep.subr.mxu0 0.0
  %296 = vmatpush1.msra.mxu0 0.0
  %297 = vmatprep.subr.mxu0 0.0
  %298 = vmatpush1.msra.mxu0 0.0
  %299 = vmatprep.mubr.f32.mxu0 0.0
  %300 = vmatmul.mubr.f32.gmra.mrb[0].mxu0 %v99
  %v301 = vpop.f32.mrb[0].mxu0
  %v302 = vadd.f32 %v88, %v301
  %v303 = vpop.f32.mrb[0].mxu0
  %v304 = vadd.f32 %v92, %v303
  %305 = vmatprep.mubr.f32.mxu0 0.0
  %306 = vmatmul.mubr.f32.gmra.mrb[0].mxu0 %v102
  %v307 = vpop.f32.mrb[0].mxu0
  %v308 = vadd.f32 %v88, %v307
  %v309 = vpop.f32.mrb[0].mxu0
  %v310 = vadd.f32 %v92, %v309
  %311 = vmatprep.mubr.f32.mxu0 0.0
  %312 = vmatmul.mubr.f32.gmra.mrb[0].mxu0 %v105
  %v313 = vpop.f32.mrb[0].mxu0
  %v314 = vadd.f32 %v88, %v313
  %v315 = vpop.f32.mrb[0].mxu0
  %v316 = vadd.f32 %v92, %v315
  %317 = vmatprep.mubr.f32.mxu0 0.0
  %318 = vmatmul.mubr.f32.gmra.mrb[0].mxu0 %v108
  %v319 = vpop.f32.mrb[0].mxu0
  %v320 = vadd.f32 %v88, %v319
  %v321 = vpop.f32.mrb[0].mxu0
  %v322 = vadd.f32 %v92, %v321
  %323 = vmatprep.mubr.f32.mxu0 0.0
  %324 = vmatmul.mubr.f32.gmra.mrb[0].mxu0 %v111
  %v325 = vpop.f32.mrb[0].mxu0
  %v326 = vadd.f32 %v88, %v325
  %v327 = vpop.f32.mrb[0].mxu0
  %v328 = vadd.f32 %v92, %v327
  %329 = vmatprep.mubr.f32.mxu0 0.0
  %330 = vmatmul.mubr.f32.gmra.mrb[0].mxu0 %v114
  %v331 = vpop.f32.mrb[0].mxu0
  %v332 = vadd.f32 %v88, %v331
  %v333 = vpop.f32.mrb[0].mxu0
  %v334 = vadd.f32 %v92, %v333
  %335 = vmatprep.mubr.f32.mxu0 0.0
  %336 = vmatmul.mubr.f32.gmra.mrb[0].mxu0 %v117
  %v337 = vpop.f32.mrb[0].mxu0
  %v338 = vadd.f32 %v88, %v337
  %v339 = vpop.f32.mrb[0].mxu0
  %v340 = vadd.f32 %v92, %v339
  %341 = vmatprep.mubr.f32.mxu0 0.0
  %342 = vmatmul.mubr.f32.gmra.mrb[0].mxu0 %v120
  %v343 = vpop.f32.mrb[0].mxu0
  %v344 = vadd.f32 %v88, %v343
  %v345 = vpop.f32.mrb[0].mxu0
  %v346 = vadd.f32 %v92, %v345
  %347 = vdwg.mxu0
  %348 = vst [vmem:[%s7] sm:$0xff] %v189
  %349 = vst [vmem:[%s7 + $0x8] sm:$0xff] %v195
  %350 = vst [vmem:[%s7 + $0x10] sm:$0xff] %v201
  %351 = vst [vmem:[%s7 + $0x18] sm:$0xff] %v207
  %352 = vst [vmem:[%s7 + $0x20] sm:$0xff] %v213
  %353 = vst [vmem:[%s7 + $0x28] sm:$0xff] %v219
  %354 = vst [vmem:[%s7 + $0x30] sm:$0xff] %v225
  %355 = vst [vmem:[%s7 + $0x38] sm:$0xff] %v231
  %v356 = vld [vmem:[#allocation2] sm:$0xff]
  %v357 = vld [vmem:[#allocation2 + $0x8] sm:$0xff]
  %v358 = vld [vmem:[#allocation2 + $0x10] sm:$0xff]
  %v359 = vld [vmem:[#allocation2 + $0x18] sm:$0xff]
  %v360 = vld [vmem:[#allocation2 + $0x20] sm:$0xff]
  %v361 = vld [vmem:[#allocation2 + $0x28] sm:$0xff]
  %v362 = vld [vmem:[#allocation2 + $0x30] sm:$0xff]
  %v363 = vld [vmem:[#allocation2 + $0x38] sm:$0xff]
  %v364 = vld [vmem:[#allocation2 + $0x40] sm:$0xff]
  %v365 = vld [vmem:[#allocation2 + $0x48] sm:$0xff]
  %v366 = vld [vmem:[#allocation2 + $0x50] sm:$0xff]
  %v367 = vld [vmem:[#allocation2 + $0x58] sm:$0xff]
  %v368 = vld [vmem:[#allocation2 + $0x60] sm:$0xff]
  %v369 = vld [vmem:[#allocation2 + $0x68] sm:$0xff]
  %v370 = vld [vmem:[#allocation2 + $0x70] sm:$0xff]
  %v371 = vld [vmem:[#allocation2 + $0x78] sm:$0xff]
  %372 = vxpose.xlu0.b32.start [1/16] %v302, 128
  %373 = vxpose.xlu0.b32.cont [2/16] %v308, 128
  %374 = vxpose.xlu0.b32.cont [3/16] %v314, 128
  %375 = vxpose.xlu0.b32.cont [4/16] %v320, 128
  %376 = vxpose.xlu0.b32.cont [5/16] %v326, 128
  %377 = vxpose.xlu0.b32.cont [6/16] %v332, 128
  %378 = vxpose.xlu0.b32.cont [7/16] %v338, 128
  %379 = vxpose.xlu0.b32.cont [8/16] %v344, 128
  %380 = vxpose.xlu0.b32.cont [9/16] 0.0, 128
  %381 = vxpose.xlu0.b32.cont [10/16] 0.0, 128
  %382 = vxpose.xlu0.b32.cont [11/16] 0.0, 128
  %383 = vxpose.xlu0.b32.cont [12/16] 0.0, 128
  %384 = vxpose.xlu0.b32.cont [13/16] 0.0, 128
  %385 = vxpose.xlu0.b32.cont [14/16] 0.0, 128
  %386 = vxpose.xlu0.b32.cont [15/16] 0.0, 128
  %387 = vxpose.xlu0.b32.end [16/16] 0.0, 128
  %v388 = vpop.trf.xlu0
  %v389 = vpop.trf.xlu0
  %v390 = vpop.trf.xlu0
  %v391 = vpop.trf.xlu0
  %v392 = vpop.trf.xlu0
  %v393 = vpop.trf.xlu0
  %v394 = vpop.trf.xlu0
  %v395 = vpop.trf.xlu0
  %v396 = vpop.trf.xlu0
  %v397 = vpop.trf.xlu0
  %v398 = vpop.trf.xlu0
  %v399 = vpop.trf.xlu0
  %v400 = vpop.trf.xlu0
  %v401 = vpop.trf.xlu0
  %v402 = vpop.trf.xlu0
  %v403 = vpop.trf.xlu0
  %vm404 = vcmask 523264
  %v406 = vsel %vm404, %v388, 0
  %v409 = vsel %vm404, %v389, 0
  %v412 = vsel %vm404, %v390, 0
  %v415 = vsel %vm404, %v391, 0
  %v418 = vsel %vm404, %v392, 0
  %v421 = vsel %vm404, %v393, 0
  %v424 = vsel %vm404, %v394, 0
  %v427 = vsel %vm404, %v395, 0
  %v430 = vsel %vm404, %v396, 0
  %v433 = vsel %vm404, %v397, 0
  %v436 = vsel %vm404, %v398, 0
  %v439 = vsel %vm404, %v399, 0
  %v442 = vsel %vm404, %v400, 0
  %v445 = vsel %vm404, %v401, 0
  %v448 = vsel %vm404, %v402, 0
  %v451 = vsel %vm404, %v403, 0
  %453 = vmatprep.subr.mxu0 0.0
  %454 = vmatpush1.msra.mxu0 %v191
  %455 = vmatprep.subr.mxu0 0.0
  %456 = vmatpush1.msra.mxu0 %v197
  %457 = vmatprep.subr.mxu0 0.0
  %458 = vmatpush1.msra.mxu0 %v203
  %459 = vmatprep.subr.mxu0 0.0
  %460 = vmatpush1.msra.mxu0 %v209
  %461 = vmatprep.subr.mxu0 0.0
  %462 = vmatpush1.msra.mxu0 %v215
  %463 = vmatprep.subr.mxu0 0.0
  %464 = vmatpush1.msra.mxu0 %v221
  %465 = vmatprep.subr.mxu0 0.0
  %466 = vmatpush1.msra.mxu0 %v227
  %467 = vmatprep.subr.mxu0 0.0
  %468 = vmatpush1.msra.mxu0 %v233
  %469 = vmatprep.subr.mxu0 0.0
  %470 = vmatpush1.msra.mxu0 0.0
  %471 = vmatprep.subr.mxu0 0.0
  %472 = vmatpush1.msra.mxu0 0.0
  %473 = vmatprep.subr.mxu0 0.0
  %474 = vmatpush1.msra.mxu0 0.0
  %475 = vmatprep.subr.mxu0 0.0
  %476 = vmatpush1.msra.mxu0 0.0
  %477 = vmatprep.subr.mxu0 0.0
  %478 = vmatpush1.msra.mxu0 0.0
  %479 = vmatprep.subr.mxu0 0.0
  %480 = vmatpush1.msra.mxu0 0.0
  %481 = vmatprep.subr.mxu0 0.0
  %482 = vmatpush1.msra.mxu0 0.0
  %483 = vmatprep.subr.mxu0 0.0
  %484 = vmatpush1.msra.mxu0 0.0
  %485 = vmatprep.subr.mxu0 0.0
  %486 = vmatpush1.msra.mxu0 0.0
  %487 = vmatprep.subr.mxu0 0.0
  %488 = vmatpush1.msra.mxu0 0.0
  %489 = vmatprep.subr.mxu0 0.0
  %490 = vmatpush1.msra.mxu0 0.0
  %491 = vmatprep.subr.mxu0 0.0
  %492 = vmatpush1.msra.mxu0 0.0
  %493 = vmatprep.subr.mxu0 0.0
  %494 = vmatpush1.msra.mxu0 0.0
  %495 = vmatprep.subr.mxu0 0.0
  %496 = vmatpush1.msra.mxu0 0.0
  %497 = vmatprep.subr.mxu0 0.0
  %498 = vmatpush1.msra.mxu0 0.0
  %499 = vmatprep.subr.mxu0 0.0
  %500 = vmatpush1.msra.mxu0 0.0
  %501 = vmatprep.subr.mxu0 0.0
  %502 = vmatpush1.msra.mxu0 0.0
  %503 = vmatprep.subr.mxu0 0.0
  %504 = vmatpush1.msra.mxu0 0.0
  %505 = vmatprep.subr.mxu0 0.0
  %506 = vmatpush1.msra.mxu0 0.0
  %507 = vmatprep.subr.mxu0 0.0
  %508 = vmatpush1.msra.mxu0 0.0
  %509 = vmatprep.subr.mxu0 0.0
  %510 = vmatpush1.msra.mxu0 0.0
  %511 = vmatprep.subr.mxu0 0.0
  %512 = vmatpush1.msra.mxu0 0.0
  %513 = vmatprep.subr.mxu0 0.0
  %514 = vmatpush1.msra.mxu0 0.0
  %515 = vmatprep.subr.mxu0 0.0
  %516 = vmatpush1.msra.mxu0 0.0
  %517 = vmatprep.mubr.f32.mxu0 0.0
  %518 = vmatmul.mubr.f32.gmra.mrb[0].mxu0 %v406
  %v519 = vpop.f32.mrb[0].mxu0
  %v520 = vadd.f32 0.0, %v519
  %v521 = vpop.f32.mrb[0].mxu0
  %522 = vmatprep.mubr.f32.mxu0 0.0
  %523 = vmatmul.mubr.f32.gmra.mrb[0].mxu0 %v409
  %v524 = vpop.f32.mrb[0].mxu0
  %v525 = vadd.f32 0.0, %v524
  %v526 = vpop.f32.mrb[0].mxu0
  %527 = vmatprep.mubr.f32.mxu0 0.0
  %528 = vmatmul.mubr.f32.gmra.mrb[0].mxu0 %v412
  %v529 = vpop.f32.mrb[0].mxu0
  %v530 = vadd.f32 0.0, %v529
  %v531 = vpop.f32.mrb[0].mxu0
  %532 = vmatprep.mubr.f32.mxu0 0.0
  %533 = vmatmul.mubr.f32.gmra.mrb[0].mxu0 %v415
  %v534 = vpop.f32.mrb[0].mxu0
  %v535 = vadd.f32 0.0, %v534
  %v536 = vpop.f32.mrb[0].mxu0
  %537 = vmatprep.mubr.f32.mxu0 0.0
  %538 = vmatmul.mubr.f32.gmra.mrb[0].mxu0 %v418
  %v539 = vpop.f32.mrb[0].mxu0
  %v540 = vadd.f32 0.0, %v539
  %v541 = vpop.f32.mrb[0].mxu0
  %542 = vmatprep.mubr.f32.mxu0 0.0
  %543 = vmatmul.mubr.f32.gmra.mrb[0].mxu0 %v421
  %v544 = vpop.f32.mrb[0].mxu0
  %v545 = vadd.f32 0.0, %v544
  %v546 = vpop.f32.mrb[0].mxu0
  %547 = vmatprep.mubr.f32.mxu0 0.0
  %548 = vmatmul.mubr.f32.gmra.mrb[0].mxu0 %v424
  %v549 = vpop.f32.mrb[0].mxu0
  %v550 = vadd.f32 0.0, %v549
  %v551 = vpop.f32.mrb[0].mxu0
  %552 = vmatprep.mubr.f32.mxu0 0.0
  %553 = vmatmul.mubr.f32.gmra.mrb[0].mxu0 %v427
  %v554 = vpop.f32.mrb[0].mxu0
  %v555 = vadd.f32 0.0, %v554
  %v556 = vpop.f32.mrb[0].mxu0
  %557 = vmatprep.mubr.f32.mxu0 0.0
  %558 = vmatmul.mubr.f32.gmra.mrb[0].mxu0 %v430
  %v559 = vpop.f32.mrb[0].mxu0
  %v560 = vadd.f32 0.0, %v559
  %v561 = vpop.f32.mrb[0].mxu0
  %562 = vmatprep.mubr.f32.mxu0 0.0
  %563 = vmatmul.mubr.f32.gmra.mrb[0].mxu0 %v433
  %v564 = vpop.f32.mrb[0].mxu0
  %v565 = vadd.f32 0.0, %v564
  %v566 = vpop.f32.mrb[0].mxu0
  %567 = vmatprep.mubr.f32.mxu0 0.0
  %568 = vmatmul.mubr.f32.gmra.mrb[0].mxu0 %v436
  %v569 = vpop.f32.mrb[0].mxu0
  %v570 = vadd.f32 0.0, %v569
  %v571 = vpop.f32.mrb[0].mxu0
  %572 = vmatprep.mubr.f32.mxu0 0.0
  %573 = vmatmul.mubr.f32.gmra.mrb[0].mxu0 %v439
  %v574 = vpop.f32.mrb[0].mxu0
  %v575 = vadd.f32 0.0, %v574
  %v576 = vpop.f32.mrb[0].mxu0
  %577 = vmatprep.mubr.f32.mxu0 0.0
  %578 = vmatmul.mubr.f32.gmra.mrb[0].mxu0 %v442
  %v579 = vpop.f32.mrb[0].mxu0
  %v580 = vadd.f32 0.0, %v579
  %v581 = vpop.f32.mrb[0].mxu0
  %582 = vmatprep.mubr.f32.mxu0 0.0
  %583 = vmatmul.mubr.f32.gmra.mrb[0].mxu0 %v445
  %v584 = vpop.f32.mrb[0].mxu0
  %v585 = vadd.f32 0.0, %v584
  %v586 = vpop.f32.mrb[0].mxu0
  %587 = vmatprep.mubr.f32.mxu0 0.0
  %588 = vmatmul.mubr.f32.gmra.mrb[0].mxu0 %v448
  %v589 = vpop.f32.mrb[0].mxu0
  %v590 = vadd.f32 0.0, %v589
  %v591 = vpop.f32.mrb[0].mxu0
  %592 = vmatprep.mubr.f32.mxu0 0.0
  %593 = vmatmul.mubr.f32.gmra.mrb[0].mxu0 %v451
  %v594 = vpop.f32.mrb[0].mxu0
  %v595 = vadd.f32 0.0, %v594
  %v596 = vpop.f32.mrb[0].mxu0
  %597 = vdwg.mxu0
  %v598 = vadd.f32 %v356, %v520
  %v599 = vadd.f32 %v357, %v525
  %v600 = vadd.f32 %v358, %v530
  %v601 = vadd.f32 %v359, %v535
  %v602 = vadd.f32 %v360, %v540
  %v603 = vadd.f32 %v361, %v545
  %v604 = vadd.f32 %v362, %v550
  %v605 = vadd.f32 %v363, %v555
  %v606 = vadd.f32 %v364, %v560
  %v607 = vadd.f32 %v365, %v565
  %v608 = vadd.f32 %v366, %v570
  %v609 = vadd.f32 %v367, %v575
  %v610 = vadd.f32 %v368, %v580
  %v611 = vadd.f32 %v369, %v585
  %v612 = vadd.f32 %v370, %v590
  %v613 = vadd.f32 %v371, %v595
  %614 = vst [vmem:[#allocation2] sm:$0xff] %v598
  %615 = vst [vmem:[#allocation2 + $0x8] sm:$0xff] %v599
  %616 = vst [vmem:[#allocation2 + $0x10] sm:$0xff] %v600
  %617 = vst [vmem:[#allocation2 + $0x18] sm:$0xff] %v601
  %618 = vst [vmem:[#allocation2 + $0x20] sm:$0xff] %v602
  %619 = vst [vmem:[#allocation2 + $0x28] sm:$0xff] %v603
  %620 = vst [vmem:[#allocation2 + $0x30] sm:$0xff] %v604
  %621 = vst [vmem:[#allocation2 + $0x38] sm:$0xff] %v605
  %622 = vst [vmem:[#allocation2 + $0x40] sm:$0xff] %v606
  %623 = vst [vmem:[#allocation2 + $0x48] sm:$0xff] %v607
  %624 = vst [vmem:[#allocation2 + $0x50] sm:$0xff] %v608
  %625 = vst [vmem:[#allocation2 + $0x58] sm:$0xff] %v609
  %626 = vst [vmem:[#allocation2 + $0x60] sm:$0xff] %v610
  %627 = vst [vmem:[#allocation2 + $0x68] sm:$0xff] %v611
  %628 = vst [vmem:[#allocation2 + $0x70] sm:$0xff] %v612
  %629 = vst [vmem:[#allocation2 + $0x78] sm:$0xff] %v613
  %v630 = vld [vmem:[#allocation3] sm:$0x1]
  %v631 = vmul.f32 %v302, %v302
  %v632 = vmul.f32 %v308, %v308
  %v633 = vmul.f32 %v314, %v314
  %v634 = vmul.f32 %v320, %v320
  %v635 = vmul.f32 %v326, %v326
  %v636 = vmul.f32 %v332, %v332
  %v637 = vmul.f32 %v338, %v338
  %v638 = vmul.f32 %v344, %v344
  %v639 = vadd.f32 %v631, %v632
  %v640 = vadd.f32 %v639, %v633
  %v641 = vadd.f32 %v640, %v634
  %v642 = vadd.f32 %v641, %v635
  %v643 = vadd.f32 %v642, %v636
  %v644 = vadd.f32 %v643, %v637
  %v645 = vadd.f32 %v644, %v638
  %v646 = vrot.slane %v645, 4
  %v647 = vadd.f32 %v645, %v646
  %v648 = vrot.slane %v647, 2
  %v649 = vadd.f32 %v647, %v648
  %v650 = vrot.slane %v649, 1
  %v651 = vadd.f32 %v649, %v650
  %v652 = vadd.f32 %v630, %v651
  %653 = vst [vmem:[#allocation3] sm:$0x1] %v652
  %v654 = vld [vmem:[#allocation4] sm:$0x1]
  %v655 = vmul.f32 %v304, %v304
  %v656 = vmul.f32 %v310, %v310
  %v657 = vmul.f32 %v316, %v316
  %v658 = vmul.f32 %v322, %v322
  %v659 = vmul.f32 %v328, %v328
  %v660 = vmul.f32 %v334, %v334
  %v661 = vmul.f32 %v340, %v340
  %v662 = vmul.f32 %v346, %v346
  %v663 = vadd.f32 %v655, %v656
  %v664 = vadd.f32 %v663, %v657
  %v665 = vadd.f32 %v664, %v658
  %v666 = vadd.f32 %v665, %v659
  %v667 = vadd.f32 %v666, %v660
  %v668 = vadd.f32 %v667, %v661
  %v669 = vadd.f32 %v668, %v662
  %v670 = vrot.slane %v669, 4
  %v671 = vadd.f32 %v669, %v670
  %v672 = vrot.slane %v671, 2
  %v673 = vadd.f32 %v671, %v672
  %v674 = vrot.slane %v673, 1
  %v675 = vadd.f32 %v673, %v674
  %v676 = vadd.f32 %v654, %v675
  %677 = vst [vmem:[#allocation4] sm:$0x1] %v676
  // Predicated region
  $region34: #{difformer_forward.2} parent=0 // pred_check
    %p678 = pneg %p29
  $region35: #{difformer_forward.2} parent=0 // pred_check_branch
    %680 = sbr.rel (%p678) target = $region37
  $region36: #{difformer_forward.2} parent=0 // pred_region
    %v681 = vld [vmem:[%s6] sm:$0x1]
    %v682 = vld [vmem:[#allocation3] sm:$0x1]
    %v683 = vmul.f32 %v682, %v681
    %vm684 = vcmask 1040384
    %v685 = vsel %vm684, %v683, 0.0
    %686 = vadd.xlane.f32.xlu0 %v685
    %v687 = vpop.xlane.xlu0 %686
    %v688 = vrot.slane %v687, 4
    %v689 = vadd.f32 %v687, %v688
    %v690 = vrot.slane %v689, 2
    %v691 = vadd.f32 %v689, %v690
    %v692 = vrot.slane %v691, 1
    %v693 = vadd.f32 %v691, %v692
    %s694 = vtos %v693
    %v695 = vld [vmem:[#allocation4] sm:$0x1]
    %v696 = vmul.f32 %v695, %v681
    %v697 = vsel %vm684, %v696, 0.0
    %698 = vadd.xlane.f32.xlu0 %v697
    %v699 = vpop.xlane.xlu0 %698
    %v700 = vrot.slane %v699, 4
    %v701 = vadd.f32 %v699, %v700
    %v702 = vrot.slane %v701, 2
    %v703 = vadd.f32 %v701, %v702
    %v704 = vrot.slane %v703, 1
    %v705 = vadd.f32 %v703, %v704
    %s706 = vtos %v705
    %s707 = smul.f32 %s694, %s706
    %v708 = vstv %s707
    %v709 = vrsqrt.pop %v708
    %s710 = vtos %v709
    %v711 = vlaneseq
    %v712 = vshrl.u32 %v711, 7
    %v713 = vadd.s32 %v712, 8
    %v714 = vadd.s32 %v712, 16
    %v715 = vadd.s32 %v712, 24
    %v716 = vadd.s32 %v712, 32
    %v717 = vadd.s32 %v712, 40
    %v718 = vadd.s32 %v712, 48
    %v719 = vadd.s32 %v712, 56
    %v720 = vadd.s32 %v712, 64
    %v721 = vadd.s32 %v712, 72
    %v722 = vadd.s32 %v712, 80
    %v723 = vadd.s32 %v712, 88
    %v724 = vadd.s32 %v712, 96
    %v725 = vadd.s32 %v712, 104
    %v726 = vadd.s32 %v712, 112
    %v727 = vadd.s32 %v712, 120
    %vm728 = vcmp.eq.s32.totalorder %v712, 0
    %vm729 = vcmp.eq.s32.totalorder %v713, 0
    %vm730 = vcmp.eq.s32.totalorder %v714, 0
    %vm731 = vcmp.eq.s32.totalorder %v715, 0
    %vm732 = vcmp.eq.s32.totalorder %v716, 0
    %vm733 = vcmp.eq.s32.totalorder %v717, 0
    %vm734 = vcmp.eq.s32.totalorder %v718, 0
    %vm735 = vcmp.eq.s32.totalorder %v719, 0
    %vm736 = vcmp.eq.s32.totalorder %v720, 0
    %vm737 = vcmp.eq.s32.totalorder %v721, 0
    %vm738 = vcmp.eq.s32.totalorder %v722, 0
    %vm739 = vcmp.eq.s32.totalorder %v723, 0
    %vm740 = vcmp.eq.s32.totalorder %v724, 0
    %vm741 = vcmp.eq.s32.totalorder %v725, 0
    %vm742 = vcmp.eq.s32.totalorder %v726, 0
    %vm743 = vcmp.eq.s32.totalorder %v727, 0
    %v744 = vstv %s710
    %v745 = vsel %vm728, 1.0, %v744
    %v746 = vsel %vm729, 1.0, %v744
    %v747 = vsel %vm730, 1.0, %v744
    %v748 = vsel %vm731, 1.0, %v744
    %v749 = vsel %vm732, 1.0, %v744
    %v750 = vsel %vm733, 1.0, %v744
    %v751 = vsel %vm734, 1.0, %v744
    %v752 = vsel %vm735, 1.0, %v744
    %v753 = vsel %vm736, 1.0, %v744
    %v754 = vsel %vm737, 1.0, %v744
    %v755 = vsel %vm738, 1.0, %v744
    %v756 = vsel %vm739, 1.0, %v744
    %v757 = vsel %vm740, 1.0, %v744
    %v758 = vsel %vm741, 1.0, %v744
    %v759 = vsel %vm742, 1.0, %v744
    %v760 = vsel %vm743, 1.0, %v744
    %v761 = vld [vmem:[%s3] sm:$0xff]
    %v762 = vld [vmem:[%s3 + $0x8] sm:$0xff]
    %v763 = vld [vmem:[%s3 + $0x10] sm:$0xff]
    %v764 = vld [vmem:[%s3 + $0x18] sm:$0xff]
    %v765 = vld [vmem:[%s3 + $0x20] sm:$0xff]
    %v766 = vld [vmem:[%s3 + $0x28] sm:$0xff]
    %v767 = vld [vmem:[%s3 + $0x30] sm:$0xff]
    %v768 = vld [vmem:[%s3 + $0x38] sm:$0xff]
    %v769 = vld [vmem:[%s3 + $0x40] sm:$0xff]
    %v770 = vld [vmem:[%s3 + $0x48] sm:$0xff]
    %v771 = vld [vmem:[%s3 + $0x50] sm:$0xff]
    %v772 = vld [vmem:[%s3 + $0x58] sm:$0xff]
    %v773 = vld [vmem:[%s3 + $0x60] sm:$0xff]
    %v774 = vld [vmem:[%s3 + $0x68] sm:$0xff]
    %v775 = vld [vmem:[%s3 + $0x70] sm:$0xff]
    %v776 = vld [vmem:[%s3 + $0x78] sm:$0xff]
    %v777 = vmul.f32 %v761, %v745
    %v778 = vmul.f32 %v762, %v746
    %v779 = vmul.f32 %v763, %v747
    %v780 = vmul.f32 %v764, %v748
    %v781 = vmul.f32 %v765, %v749
    %v782 = vmul.f32 %v766, %v750
    %v783 = vmul.f32 %v767, %v751
    %v784 = vmul.f32 %v768, %v752
    %v785 = vmul.f32 %v769, %v753
    %v786 = vmul.f32 %v770, %v754
    %v787 = vmul.f32 %v771, %v755
    %v788 = vmul.f32 %v772, %v756
    %v789 = vmul.f32 %v773, %v757
    %v790 = vmul.f32 %v774, %v758
    %v791 = vmul.f32 %v775, %v759
    %v792 = vmul.f32 %v776, %v760
    %v793 = vld [vmem:[#allocation2] sm:$0xff]
    %v794 = vld [vmem:[#allocation2 + $0x8] sm:$0xff]
    %v795 = vld [vmem:[#allocation2 + $0x10] sm:$0xff]
    %v796 = vld [vmem:[#allocation2 + $0x18] sm:$0xff]
    %v797 = vld [vmem:[#allocation2 + $0x20] sm:$0xff]
    %v798 = vld [vmem:[#allocation2 + $0x28] sm:$0xff]
    %v799 = vld [vmem:[#allocation2 + $0x30] sm:$0xff]
    %v800 = vld [vmem:[#allocation2 + $0x38] sm:$0xff]
    %v801 = vld [vmem:[#allocation2 + $0x40] sm:$0xff]
    %v802 = vld [vmem:[#allocation2 + $0x48] sm:$0xff]
    %v803 = vld [vmem:[#allocation2 + $0x50] sm:$0xff]
    %v804 = vld [vmem:[#allocation2 + $0x58] sm:$0xff]
    %v805 = vld [vmem:[#allocation2 + $0x60] sm:$0xff]
    %v806 = vld [vmem:[#allocation2 + $0x68] sm:$0xff]
    %v807 = vld [vmem:[#allocation2 + $0x70] sm:$0xff]
    %v808 = vld [vmem:[#allocation2 + $0x78] sm:$0xff]
    %v809 = vld [vmem:[%s4] sm:$0xff]
    %v810 = vld [vmem:[%s4 + $0x8] sm:$0xff]
    %v811 = vld [vmem:[%s4 + $0x10] sm:$0xff]
    %v812 = vld [vmem:[%s4 + $0x18] sm:$0xff]
    %v813 = vld [vmem:[%s4 + $0x20] sm:$0xff]
    %v814 = vld [vmem:[%s4 + $0x28] sm:$0xff]
    %v815 = vld [vmem:[%s4 + $0x30] sm:$0xff]
    %v816 = vld [vmem:[%s4 + $0x38] sm:$0xff]
    %v817 = vld [vmem:[%s4 + $0x40] sm:$0xff]
    %v818 = vld [vmem:[%s4 + $0x48] sm:$0xff]
    %v819 = vld [vmem:[%s4 + $0x50] sm:$0xff]
    %v820 = vld [vmem:[%s4 + $0x58] sm:$0xff]
    %v821 = vld [vmem:[%s4 + $0x60] sm:$0xff]
    %v822 = vld [vmem:[%s4 + $0x68] sm:$0xff]
    %v823 = vld [vmem:[%s4 + $0x70] sm:$0xff]
    %v824 = vld [vmem:[%s4 + $0x78] sm:$0xff]
    %825 = vmatprep.subr.mxu0 0.0
    %826 = vmatpush1.msra.mxu0 %v809
    %827 = vmatprep.subr.mxu0 0.0
    %828 = vmatpush1.msra.mxu0 %v810
    %829 = vmatprep.subr.mxu0 0.0
    %830 = vmatpush1.msra.mxu0 %v811
    %831 = vmatprep.subr.mxu0 0.0
    %832 = vmatpush1.msra.mxu0 %v812
    %833 = vmatprep.subr.mxu0 0.0
    %834 = vmatpush1.msra.mxu0 %v813
    %835 = vmatprep.subr.mxu0 0.0
    %836 = vmatpush1.msra.mxu0 %v814
    %837 = vmatprep.subr.mxu0 0.0
    %838 = vmatpush1.msra.mxu0 %v815
    %839 = vmatprep.subr.mxu0 0.0
    %840 = vmatpush1.msra.mxu0 %v816
    %841 = vmatprep.subr.mxu0 0.0
    %842 = vmatpush1.msra.mxu0 %v817
    %843 = vmatprep.subr.mxu0 0.0
    %844 = vmatpush1.msra.mxu0 %v818
    %845 = vmatprep.subr.mxu0 0.0
    %846 = vmatpush1.msra.mxu0 %v819
    %847 = vmatprep.subr.mxu0 0.0
    %848 = vmatpush1.msra.mxu0 %v820
    %849 = vmatprep.subr.mxu0 0.0
    %850 = vmatpush1.msra.mxu0 %v821
    %851 = vmatprep.subr.mxu0 0.0
    %852 = vmatpush1.msra.mxu0 %v822
    %853 = vmatprep.subr.mxu0 0.0
    %854 = vmatpush1.msra.mxu0 %v823
    %855 = vmatprep.subr.mxu0 0.0
    %856 = vmatpush1.msra.mxu0 %v824
    %857 = vmatprep.subr.mxu0 0.0
    %858 = vmatpush1.msra.mxu0 0.0
    %859 = vmatprep.subr.mxu0 0.0
    %860 = vmatpush1.msra.mxu0 0.0
    %861 = vmatprep.subr.mxu0 0.0
    %862 = vmatpush1.msra.mxu0 0.0
    %863 = vmatprep.subr.mxu0 0.0
    %864 = vmatpush1.msra.mxu0 0.0
    %865 = vmatprep.subr.mxu0 0.0
    %866 = vmatpush1.msra.mxu0 0.0
    %867 = vmatprep.subr.mxu0 0.0
    %868 = vmatpush1.msra.mxu0 0.0
    %869 = vmatprep.subr.mxu0 0.0
    %870 = vmatpush1.msra.mxu0 0.0
    %871 = vmatprep.subr.mxu0 0.0
    %872 = vmatpush1.msra.mxu0 0.0
    %873 = vmatprep.subr.mxu0 0.0
    %874 = vmatpush1.msra.mxu0 0.0
    %875 = vmatprep.subr.mxu0 0.0
    %876 = vmatpush1.msra.mxu0 0.0
    %877 = vmatprep.subr.mxu0 0.0
    %878 = vmatpush1.msra.mxu0 0.0
    %879 = vmatprep.subr.mxu0 0.0
    %880 = vmatpush1.msra.mxu0 0.0
    %881 = vmatprep.subr.mxu0 0.0
    %882 = vmatpush1.msra.mxu0 0.0
    %883 = vmatprep.subr.mxu0 0.0
    %884 = vmatpush1.msra.mxu0 0.0
    %885 = vmatprep.subr.mxu0 0.0
    %886 = vmatpush1.msra.mxu0 0.0
    %887 = vmatprep.subr.mxu0 0.0
    %888 = vmatpush1.msra.mxu0 0.0
    %889 = vmatprep.mubr.f32.mxu0 0.0
    %890 = vmatmul.mubr.f32.gmra.mrb[0].mxu0 %v793
    %v891 = vpop.f32.mrb[0].mxu0
    %v892 = vadd.f32 0.0, %v891
    %v893 = vpop.f32.mrb[0].mxu0
    %894 = vmatprep.mubr.f32.mxu0 0.0
    %895 = vmatmul.mubr.f32.gmra.mrb[0].mxu0 %v794
    %v896 = vpop.f32.mrb[0].mxu0
    %v897 = vadd.f32 0.0, %v896
    %v898 = vpop.f32.mrb[0].mxu0
    %899 = vmatprep.mubr.f32.mxu0 0.0
    %900 = vmatmul.mubr.f32.gmra.mrb[0].mxu0 %v795
    %v901 = vpop.f32.mrb[0].mxu0
    %v902 = vadd.f32 0.0, %v901
    %v903 = vpop.f32.mrb[0].mxu0
    %904 = vmatprep.mubr.f32.mxu0 0.0
    %905 = vmatmul.mubr.f32.gmra.mrb[0].mxu0 %v796
    %v906 = vpop.f32.mrb[0].mxu0
    %v907 = vadd.f32 0.0, %v906
    %v908 = vpop.f32.mrb[0].mxu0
    %909 = vmatprep.mubr.f32.mxu0 0.0
    %910 = vmatmul.mubr.f32.gmra.mrb[0].mxu0 %v797
    %v911 = vpop.f32.mrb[0].mxu0
    %v912 = vadd.f32 0.0, %v911
    %v913 = vpop.f32.mrb[0].mxu0
    %914 = vmatprep.mubr.f32.mxu0 0.0
    %915 = vmatmul.mubr.f32.gmra.mrb[0].mxu0 %v798
    %v916 = vpop.f32.mrb[0].mxu0
    %v917 = vadd.f32 0.0, %v916
    %v918 = vpop.f32.mrb[0].mxu0
    %919 = vmatprep.mubr.f32.mxu0 0.0
    %920 = vmatmul.mubr.f32.gmra.mrb[0].mxu0 %v799
    %v921 = vpop.f32.mrb[0].mxu0
    %v922 = vadd.f32 0.0, %v921
    %v923 = vpop.f32.mrb[0].mxu0
    %924 = vmatprep.mubr.f32.mxu0 0.0
    %925 = vmatmul.mubr.f32.gmra.mrb[0].mxu0 %v800
    %v926 = vpop.f32.mrb[0].mxu0
    %v927 = vadd.f32 0.0, %v926
    %v928 = vpop.f32.mrb[0].mxu0
    %929 = vmatprep.mubr.f32.mxu0 0.0
    %930 = vmatmul.mubr.f32.gmra.mrb[0].mxu0 %v801
    %v931 = vpop.f32.mrb[0].mxu0
    %v932 = vadd.f32 0.0, %v931
    %v933 = vpop.f32.mrb[0].mxu0
    %934 = vmatprep.mubr.f32.mxu0 0.0
    %935 = vmatmul.mubr.f32.gmra.mrb[0].mxu0 %v802
    %v936 = vpop.f32.mrb[0].mxu0
    %v937 = vadd.f32 0.0, %v936
    %v938 = vpop.f32.mrb[0].mxu0
    %939 = vmatprep.mubr.f32.mxu0 0.0
    %940 = vmatmul.mubr.f32.gmra.mrb[0].mxu0 %v803
    %v941 = vpop.f32.mrb[0].mxu0
    %v942 = vadd.f32 0.0, %v941
    %v943 = vpop.f32.mrb[0].mxu0
    %944 = vmatprep.mubr.f32.mxu0 0.0
    %945 = vmatmul.mubr.f32.gmra.mrb[0].mxu0 %v804
    %v946 = vpop.f32.mrb[0].mxu0
    %v947 = vadd.f32 0.0, %v946
    %v948 = vpop.f32.mrb[0].mxu0
    %949 = vmatprep.mubr.f32.mxu0 0.0
    %950 = vmatmul.mubr.f32.gmra.mrb[0].mxu0 %v805
    %v951 = vpop.f32.mrb[0].mxu0
    %v952 = vadd.f32 0.0, %v951
    %v953 = vpop.f32.mrb[0].mxu0
    %954 = vmatprep.mubr.f32.mxu0 0.0
    %955 = vmatmul.mubr.f32.gmra.mrb[0].mxu0 %v806
    %v956 = vpop.f32.mrb[0].mxu0
    %v957 = vadd.f32 0.0, %v956
    %v958 = vpop.f32.mrb[0].mxu0
    %959 = vmatprep.mubr.f32.mxu0 0.0
    %960 = vmatmul.mubr.f32.gmra.mrb[0].mxu0 %v807
    %v961 = vpop.f32.mrb[0].mxu0
    %v962 = vadd.f32 0.0, %v961
    %v963 = vpop.f32.mrb[0].mxu0
    %964 = vmatprep.mubr.f32.mxu0 0.0
    %965 = vmatmul.mubr.f32.gmra.mrb[0].mxu0 %v808
    %v966 = vpop.f32.mrb[0].mxu0
    %v967 = vadd.f32 0.0, %v966
    %v968 = vpop.f32.mrb[0].mxu0
    %969 = vdwg.mxu0
    %v970 = vmul.f32 %v892, %v777
    %v971 = vmul.f32 %v897, %v778
    %v972 = vmul.f32 %v902, %v779
    %v973 = vmul.f32 %v907, %v780
    %v974 = vmul.f32 %v912, %v781
    %v975 = vmul.f32 %v917, %v782
    %v976 = vmul.f32 %v922, %v783
    %v977 = vmul.f32 %v927, %v784
    %v978 = vmul.f32 %v932, %v785
    %v979 = vmul.f32 %v937, %v786
    %v980 = vmul.f32 %v942, %v787
    %v981 = vmul.f32 %v947, %v788
    %v982 = vmul.f32 %v952, %v789
    %v983 = vmul.f32 %v957, %v790
    %v984 = vmul.f32 %v962, %v791
    %v985 = vmul.f32 %v967, %v792
    %986 = vst [vmem:[%s8] sm:$0xff] %v970
    %987 = vst [vmem:[%s8 + $0x8] sm:$0xff] %v971
    %988 = vst [vmem:[%s8 + $0x10] sm:$0xff] %v972
    %989 = vst [vmem:[%s8 + $0x18] sm:$0xff] %v973
    %990 = vst [vmem:[%s8 + $0x20] sm:$0xff] %v974
    %991 = vst [vmem:[%s8 + $0x28] sm:$0xff] %v975
    %992 = vst [vmem:[%s8 + $0x30] sm:$0xff] %v976
    %993 = vst [vmem:[%s8 + $0x38] sm:$0xff] %v977
    %994 = vst [vmem:[%s8 + $0x40] sm:$0xff] %v978
    %995 = vst [vmem:[%s8 + $0x48] sm:$0xff] %v979
    %996 = vst [vmem:[%s8 + $0x50] sm:$0xff] %v980
    %997 = vst [vmem:[%s8 + $0x58] sm:$0xff] %v981
    %998 = vst [vmem:[%s8 + $0x60] sm:$0xff] %v982
    %999 = vst [vmem:[%s8 + $0x68] sm:$0xff] %v983
    %1000 = vst [vmem:[%s8 + $0x70] sm:$0xff] %v984
    %1001 = vst [vmem:[%s8 + $0x78] sm:$0xff] %v985
    %v1002 = vld [vmem:[%s5] sm:$0xff]
    %v1003 = vld [vmem:[%s5 + $0x8] sm:$0xff]
    %v1004 = vld [vmem:[%s5 + $0x10] sm:$0xff]
    %v1005 = vld [vmem:[%s5 + $0x18] sm:$0xff]
    %v1006 = vld [vmem:[%s5 + $0x20] sm:$0xff]
    %v1007 = vld [vmem:[%s5 + $0x28] sm:$0xff]
    %v1008 = vld [vmem:[%s5 + $0x30] sm:$0xff]
    %v1009 = vld [vmem:[%s5 + $0x38] sm:$0xff]
    %v1010 = vld [vmem:[%s5 + $0x40] sm:$0xff]
    %v1011 = vld [vmem:[%s5 + $0x48] sm:$0xff]
    %v1012 = vld [vmem:[%s5 + $0x50] sm:$0xff]
    %v1013 = vld [vmem:[%s5 + $0x58] sm:$0xff]
    %v1014 = vld [vmem:[%s5 + $0x60] sm:$0xff]
    %v1015 = vld [vmem:[%s5 + $0x68] sm:$0xff]
    %v1016 = vld [vmem:[%s5 + $0x70] sm:$0xff]
    %v1017 = vld [vmem:[%s5 + $0x78] sm:$0xff]
    %1018 = vmatprep.subr.mxu0 0.0
    %1019 = vmatpush1.msra.mxu0 %v1002
    %1020 = vmatprep.subr.mxu0 0.0
    %1021 = vmatpush1.msra.mxu0 %v1003
    %1022 = vmatprep.subr.mxu0 0.0
    %1023 = vmatpush1.msra.mxu0 %v1004
    %1024 = vmatprep.subr.mxu0 0.0
    %1025 = vmatpush1.msra.mxu0 %v1005
    %1026 = vmatprep.subr.mxu0 0.0
    %1027 = vmatpush1.msra.mxu0 %v1006
    %1028 = vmatprep.subr.mxu0 0.0
    %1029 = vmatpush1.msra.mxu0 %v1007
    %1030 = vmatprep.subr.mxu0 0.0
    %1031 = vmatpush1.msra.mxu0 %v1008
    %1032 = vmatprep.subr.mxu0 0.0
    %1033 = vmatpush1.msra.mxu0 %v1009
    %1034 = vmatprep.subr.mxu0 0.0
    %1035 = vmatpush1.msra.mxu0 %v1010
    %1036 = vmatprep.subr.mxu0 0.0
    %1037 = vmatpush1.msra.mxu0 %v1011
    %1038 = vmatprep.subr.mxu0 0.0
    %1039 = vmatpush1.msra.mxu0 %v1012
    %1040 = vmatprep.subr.mxu0 0.0
    %1041 = vmatpush1.msra.mxu0 %v1013
    %1042 = vmatprep.subr.mxu0 0.0
    %1043 = vmatpush1.msra.mxu0 %v1014
    %1044 = vmatprep.subr.mxu0 0.0
    %1045 = vmatpush1.msra.mxu0 %v1015
    %1046 = vmatprep.subr.mxu0 0.0
    %1047 = vmatpush1.msra.mxu0 %v1016
    %1048 = vmatprep.subr.mxu0 0.0
    %1049 = vmatpush1.msra.mxu0 %v1017
    %1050 = vmatprep.subr.mxu0 0.0
    %1051 = vmatpush1.msra.mxu0 0.0
    %1052 = vmatprep.subr.mxu0 0.0
    %1053 = vmatpush1.msra.mxu0 0.0
    %1054 = vmatprep.subr.mxu0 0.0
    %1055 = vmatpush1.msra.mxu0 0.0
    %1056 = vmatprep.subr.mxu0 0.0
    %1057 = vmatpush1.msra.mxu0 0.0
    %1058 = vmatprep.subr.mxu0 0.0
    %1059 = vmatpush1.msra.mxu0 0.0
    %1060 = vmatprep.subr.mxu0 0.0
    %1061 = vmatpush1.msra.mxu0 0.0
    %1062 = vmatprep.subr.mxu0 0.0
    %1063 = vmatpush1.msra.mxu0 0.0
    %1064 = vmatprep.subr.mxu0 0.0
    %1065 = vmatpush1.msra.mxu0 0.0
    %1066 = vmatprep.subr.mxu0 0.0
    %1067 = vmatpush1.msra.mxu0 0.0
    %1068 = vmatprep.subr.mxu0 0.0
    %1069 = vmatpush1.msra.mxu0 0.0
    %1070 = vmatprep.subr.mxu0 0.0
    %1071 = vmatpush1.msra.mxu0 0.0
    %1072 = vmatprep.subr.mxu0 0.0
    %1073 = vmatpush1.msra.mxu0 0.0
    %1074 = vmatprep.subr.mxu0 0.0
    %1075 = vmatpush1.msra.mxu0 0.0
    %1076 = vmatprep.subr.mxu0 0.0
    %1077 = vmatpush1.msra.mxu0 0.0
    %1078 = vmatprep.subr.mxu0 0.0
    %1079 = vmatpush1.msra.mxu0 0.0
    %1080 = vmatprep.subr.mxu0 0.0
    %1081 = vmatpush1.msra.mxu0 0.0
    %1082 = vmatprep.mubr.f32.mxu0 0.0
    %1083 = vmatmul.mubr.f32.gmra.mrb[0].mxu0 %v793
    %v1084 = vpop.f32.mrb[0].mxu0
    %v1085 = vadd.f32 0.0, %v1084
    %v1086 = vpop.f32.mrb[0].mxu0
    %1087 = vmatprep.mubr.f32.mxu0 0.0
    %1088 = vmatmul.mubr.f32.gmra.mrb[0].mxu0 %v794
    %v1089 = vpop.f32.mrb[0].mxu0
    %v1090 = vadd.f32 0.0, %v1089
    %v1091 = vpop.f32.mrb[0].mxu0
    %1092 = vmatprep.mubr.f32.mxu0 0.0
    %1093 = vmatmul.mubr.f32.gmra.mrb[0].mxu0 %v795
    %v1094 = vpop.f32.mrb[0].mxu0
    %v1095 = vadd.f32 0.0, %v1094
    %v1096 = vpop.f32.mrb[0].mxu0
    %1097 = vmatprep.mubr.f32.mxu0 0.0
    %1098 = vmatmul.mubr.f32.gmra.mrb[0].mxu0 %v796
    %v1099 = vpop.f32.mrb[0].mxu0
    %v1100 = vadd.f32 0.0, %v1099
    %v1101 = vpop.f32.mrb[0].mxu0
    %1102 = vmatprep.mubr.f32.mxu0 0.0
    %1103 = vmatmul.mubr.f32.gmra.mrb[0].mxu0 %v797
    %v1104 = vpop.f32.mrb[0].mxu0
    %v1105 = vadd.f32 0.0, %v1104
    %v1106 = vpop.f32.mrb[0].mxu0
    %1107 = vmatprep.mubr.f32.mxu0 0.0
    %1108 = vmatmul.mubr.f32.gmra.mrb[0].mxu0 %v798
    %v1109 = vpop.f32.mrb[0].mxu0
    %v1110 = vadd.f32 0.0, %v1109
    %v1111 = vpop.f32.mrb[0].mxu0
    %1112 = vmatprep.mubr.f32.mxu0 0.0
    %1113 = vmatmul.mubr.f32.gmra.mrb[0].mxu0 %v799
    %v1114 = vpop.f32.mrb[0].mxu0
    %v1115 = vadd.f32 0.0, %v1114
    %v1116 = vpop.f32.mrb[0].mxu0
    %1117 = vmatprep.mubr.f32.mxu0 0.0
    %1118 = vmatmul.mubr.f32.gmra.mrb[0].mxu0 %v800
    %v1119 = vpop.f32.mrb[0].mxu0
    %v1120 = vadd.f32 0.0, %v1119
    %v1121 = vpop.f32.mrb[0].mxu0
    %1122 = vmatprep.mubr.f32.mxu0 0.0
    %1123 = vmatmul.mubr.f32.gmra.mrb[0].mxu0 %v801
    %v1124 = vpop.f32.mrb[0].mxu0
    %v1125 = vadd.f32 0.0, %v1124
    %v1126 = vpop.f32.mrb[0].mxu0
    %1127 = vmatprep.mubr.f32.mxu0 0.0
    %1128 = vmatmul.mubr.f32.gmra.mrb[0].mxu0 %v802
    %v1129 = vpop.f32.mrb[0].mxu0
    %v1130 = vadd.f32 0.0, %v1129
    %v1131 = vpop.f32.mrb[0].mxu0
    %1132 = vmatprep.mubr.f32.mxu0 0.0
    %1133 = vmatmul.mubr.f32.gmra.mrb[0].mxu0 %v803
    %v1134 = vpop.f32.mrb[0].mxu0
    %v1135 = vadd.f32 0.0, %v1134
    %v1136 = vpop.f32.mrb[0].mxu0
    %1137 = vmatprep.mubr.f32.mxu0 0.0
    %1138 = vmatmul.mubr.f32.gmra.mrb[0].mxu0 %v804
    %v1139 = vpop.f32.mrb[0].mxu0
    %v1140 = vadd.f32 0.0, %v1139
    %v1141 = vpop.f32.mrb[0].mxu0
    %1142 = vmatprep.mubr.f32.mxu0 0.0
    %1143 = vmatmul.mubr.f32.gmra.mrb[0].mxu0 %v805
    %v1144 = vpop.f32.mrb[0].mxu0
    %v1145 = vadd.f32 0.0, %v1144
    %v1146 = vpop.f32.mrb[0].mxu0
    %1147 = vmatprep.mubr.f32.mxu0 0.0
    %1148 = vmatmul.mubr.f32.gmra.mrb[0].mxu0 %v806
    %v1149 = vpop.f32.mrb[0].mxu0
    %v1150 = vadd.f32 0.0, %v1149
    %v1151 = vpop.f32.mrb[0].mxu0
    %1152 = vmatprep.mubr.f32.mxu0 0.0
    %1153 = vmatmul.mubr.f32.gmra.mrb[0].mxu0 %v807
    %v1154 = vpop.f32.mrb[0].mxu0
    %v1155 = vadd.f32 0.0, %v1154
    %v1156 = vpop.f32.mrb[0].mxu0
    %1157 = vmatprep.mubr.f32.mxu0 0.0
    %1158 = vmatmul.mubr.f32.gmra.mrb[0].mxu0 %v808
    %v1159 = vpop.f32.mrb[0].mxu0
    %v1160 = vadd.f32 0.0, %v1159
    %v1161 = vpop.f32.mrb[0].mxu0
    %1162 = vdwg.mxu0
    %v1163 = vmul.f32 %v1085, %v777
    %v1164 = vmul.f32 %v1090, %v778
    %v1165 = vmul.f32 %v1095, %v779
    %v1166 = vmul.f32 %v1100, %v780
    %v1167 = vmul.f32 %v1105, %v781
    %v1168 = vmul.f32 %v1110, %v782
    %v1169 = vmul.f32 %v1115, %v783
    %v1170 = vmul.f32 %v1120, %v784
    %v1171 = vmul.f32 %v1125, %v785
    %v1172 = vmul.f32 %v1130, %v786
    %v1173 = vmul.f32 %v1135, %v787
    %v1174 = vmul.f32 %v1140, %v788
    %v1175 = vmul.f32 %v1145, %v789
    %v1176 = vmul.f32 %v1150, %v790
    %v1177 = vmul.f32 %v1155, %v791
    %v1178 = vmul.f32 %v1160, %v792
    %1179 = vst [vmem:[%s9] sm:$0xff] %v1163
    %1180 = vst [vmem:[%s9 + $0x8] sm:$0xff] %v1164
    %1181 = vst [vmem:[%s9 + $0x10] sm:$0xff] %v1165
    %1182 = vst [vmem:[%s9 + $0x18] sm:$0xff] %v1166
    %1183 = vst [vmem:[%s9 + $0x20] sm:$0xff] %v1167
    %1184 = vst [vmem:[%s9 + $0x28] sm:$0xff] %v1168
    %1185 = vst [vmem:[%s9 + $0x30] sm:$0xff] %v1169
    %1186 = vst [vmem:[%s9 + $0x38] sm:$0xff] %v1170
    %1187 = vst [vmem:[%s9 + $0x40] sm:$0xff] %v1171
    %1188 = vst [vmem:[%s9 + $0x48] sm:$0xff] %v1172
    %1189 = vst [vmem:[%s9 + $0x50] sm:$0xff] %v1173
    %1190 = vst [vmem:[%s9 + $0x58] sm:$0xff] %v1174
    %1191 = vst [vmem:[%s9 + $0x60] sm:$0xff] %v1175
    %1192 = vst [vmem:[%s9 + $0x68] sm:$0xff] %v1176
    %1193 = vst [vmem:[%s9 + $0x70] sm:$0xff] %v1177
    %1194 = vst [vmem:[%s9 + $0x78] sm:$0xff] %v1178
  $region37: #{difformer_forward.2} parent=0 // pred_fallthru
    _
  // Predicated region
  $region38: #{difformer_forward.2} parent=0 // pred_check
    _
  $region39: #{difformer_forward.2} parent=0 // pred_check_branch
    %1196 = sbr.rel (0) target = $region41
  $region40: #{difformer_forward.2} parent=0 // pred_region
    _
  $region41: #{difformer_forward.2} parent=0 // pred_fallthru
    _
  // Predicated region
  $region42: #{difformer_forward.2} parent=0 // pred_check
    _
  $region43: #{difformer_forward.2} parent=0 // pred_check_branch
    %1198 = sbr.rel (0) target = $region45
  $region44: #{difformer_forward.2} parent=0 // pred_region
    _
  $region45: #{difformer_forward.2} parent=0 // pred_fallthru
    _
  // Predicated region
  $region46: #{difformer_forward.2} parent=0 // pred_check
    _
  $region47: #{difformer_forward.2} parent=0 // pred_check_branch
    %1200 = sbr.rel (0) target = $region49
  $region48: #{difformer_forward.2} parent=0 // pred_region
    _
  $region49: #{difformer_forward.2} parent=0 // pred_fallthru
    _
  // Predicated region
  $region50: #{difformer_forward.2} parent=0 // pred_check
    _
  $region51: #{difformer_forward.2} parent=0 // pred_check_branch
    %1202 = sbr.rel (0) target = $region53
  $region52: #{difformer_forward.2} parent=0 // pred_region
    _
  $region53: #{difformer_forward.2} parent=0 // pred_fallthru
    _
  // Predicated region
  $region54: #{difformer_forward.2} parent=0 // pred_check
    _
  $region55: #{difformer_forward.2} parent=0 // pred_check_branch
    %1204 = sbr.rel (0) target = $region57
  $region56: #{difformer_forward.2} parent=0 // pred_region
    _
  $region57: #{difformer_forward.2} parent=0 // pred_fallthru
    _
  // Predicated region
  $region58: #{difformer_forward.2} parent=0 // pred_check
    _
  $region59: #{difformer_forward.2} parent=0 // pred_check_branch
    %1206 = sbr.rel (0) target = $region61
  $region60: #{difformer_forward.2} parent=0 // pred_region
    _
  $region61: #{difformer_forward.2} parent=0 // pred_fallthru
    _

// kernel: difformer_forward.3
$region0: #{difformer_forward.3}
  #allocation0 [shape = 'u32[]', space=smem, size = 0x4, offset = 0x4, fixed_abs, tag = 'smem constant byte address 0x4 - core index']
  #allocation1 [shape = 'u32[144,128]{1,0:T(1,128)}', space=vmem, size = 0x12000, scoped, tag = 'internal scratch']
  %s0 = inlined_call_operand.vmem [shape: f32[64,32], index: 0, kind: input, shape index: {}]
  %s1 = inlined_call_operand.vmem [shape: f32[64,32], index: 1, kind: input, shape index: {}]
  %s2 = inlined_call_operand.vmem [shape: f32[32,128], index: 2, kind: input, shape index: {}]
  %s3 = inlined_call_operand.vmem [shape: f32[1,128], index: 3, kind: input, shape index: {}]
  %s4 = inlined_call_operand.vmem [shape: f32[128,128], index: 4, kind: input, shape index: {}]
  %s5 = inlined_call_operand.vmem [shape: f32[128,128], index: 5, kind: input, shape index: {}]
  %s6 = inlined_call_operand.vmem [shape: f32[64,128], index: 6, kind: input, shape index: {}]
  %s7 = inlined_call_operand.vmem [shape: f32[64,64], index: 7, kind: input, shape index: {}]
  %s8 = inlined_call_operand.vmem [shape: f32[128,128], index: 8, kind: input, shape index: {}]
  %s9 = inlined_call_operand.vmem [shape: f32[32,128], index: 9, kind: input, shape index: {}]
  %s10 = inlined_call_operand.vmem [shape: f32[1,128], index: 10, kind: input, shape index: {}]
  %s11 = inlined_call_operand.vmem [shape: f32[1,128], index: 11, kind: input, shape index: {}]
  %s12 = inlined_call_operand.vmem [shape: f32[64,128], index: 12, kind: output, shape index: {}]
  %s13 = sld [smem:[#allocation0]]
  $region58: #{difformer_forward.3} parent=0
    _
  %s15 = ssub.s32 1, %s13
  %s16 = scalar_select 0, %s15, %s13
  // Predicated region
  $region2: #{difformer_forward.3} parent=0 // pred_check
    _
  $region3: #{difformer_forward.3} parent=0 // pred_check_branch
    %18 = sbr.rel (0) target = $region5
  $region4: #{difformer_forward.3} parent=0 // pred_region
    _
  $region5: #{difformer_forward.3} parent=0 // pred_fallthru
    _
  // Predicated region
  $region6: #{difformer_forward.3} parent=0 // pred_check
    _
  $region7: #{difformer_forward.3} parent=0 // pred_check_branch
    %20 = sbr.rel (0) target = $region9
  $region8: #{difformer_forward.3} parent=0 // pred_region
    _
  $region9: #{difformer_forward.3} parent=0 // pred_fallthru
    _
  // Predicated region
  $region10: #{difformer_forward.3} parent=0 // pred_check
    _
  $region11: #{difformer_forward.3} parent=0 // pred_check_branch
    %22 = sbr.rel (0) target = $region13
  $region12: #{difformer_forward.3} parent=0 // pred_region
    _
  $region13: #{difformer_forward.3} parent=0 // pred_fallthru
    _
  // Predicated region
  $region14: #{difformer_forward.3} parent=0 // pred_check
    _
  $region15: #{difformer_forward.3} parent=0 // pred_check_branch
    %24 = sbr.rel (0) target = $region17
  $region16: #{difformer_forward.3} parent=0 // pred_region
    _
  $region17: #{difformer_forward.3} parent=0 // pred_fallthru
    _
  // Predicated region
  $region18: #{difformer_forward.3} parent=0 // pred_check
    _
  $region19: #{difformer_forward.3} parent=0 // pred_check_branch
    %26 = sbr.rel (0) target = $region21
  $region20: #{difformer_forward.3} parent=0 // pred_region
    _
  $region21: #{difformer_forward.3} parent=0 // pred_fallthru
    _
  // Predicated region
  $region22: #{difformer_forward.3} parent=0 // pred_check
    _
  $region23: #{difformer_forward.3} parent=0 // pred_check_branch
    %28 = sbr.rel (0) target = $region25
  $region24: #{difformer_forward.3} parent=0 // pred_region
    _
  $region25: #{difformer_forward.3} parent=0 // pred_fallthru
    _
  // Predicated region
  $region26: #{difformer_forward.3} parent=0 // pred_check
    _
  $region27: #{difformer_forward.3} parent=0 // pred_check_branch
    %30 = sbr.rel (0) target = $region29
  $region28: #{difformer_forward.3} parent=0 // pred_region
    _
  $region29: #{difformer_forward.3} parent=0 // pred_fallthru
    _
  // Predicated region
  $region30: #{difformer_forward.3} parent=0 // pred_check
    _
  $region31: #{difformer_forward.3} parent=0 // pred_check_branch
    %32 = sbr.rel (0) target = $region33
  $region32: #{difformer_forward.3} parent=0 // pred_region
    _
  $region33: #{difformer_forward.3} parent=0 // pred_fallthru
    _
  // Predicated region
  $region34: #{difformer_forward.3} parent=0 // pred_check
    _
  $region35: #{difformer_forward.3} parent=0 // pred_check_branch
    %34 = sbr.rel (0) target = $region37
  $region36: #{difformer_forward.3} parent=0 // pred_region
    _
  $region37: #{difformer_forward.3} parent=0 // pred_fallthru
    _
  // Predicated region
  $region38: #{difformer_forward.3} parent=0 // pred_check
    _
  $region39: #{difformer_forward.3} parent=0 // pred_check_branch
    %36 = sbr.rel (0) target = $region41
  $region40: #{difformer_forward.3} parent=0 // pred_region
    _
  $region41: #{difformer_forward.3} parent=0 // pred_fallthru
    _
  // Predicated region
  $region42: #{difformer_forward.3} parent=0 // pred_check
    _
  $region43: #{difformer_forward.3} parent=0 // pred_check_branch
    %38 = sbr.rel (0) target = $region45
  $region44: #{difformer_forward.3} parent=0 // pred_region
    _
  $region45: #{difformer_forward.3} parent=0 // pred_fallthru
    _
  // Predicated region
  $region46: #{difformer_forward.3} parent=0 // pred_check
    _
  $region47: #{difformer_forward.3} parent=0 // pred_check_branch
    %40 = sbr.rel (0) target = $region49
  $region48: #{difformer_forward.3} parent=0 // pred_region
    _
  $region49: #{difformer_forward.3} parent=0 // pred_fallthru
    _
  %v41 = vld [vmem:[%s0] sm:$0xff]
  %v42 = vld [vmem:[%s0 + $0x8] sm:$0xff]
  %v43 = vld [vmem:[%s0 + $0x10] sm:$0xff]
  %v44 = vld [vmem:[%s0 + $0x18] sm:$0xff]
  %v45 = vld [vmem:[%s0 + $0x20] sm:$0xff]
  %v46 = vld [vmem:[%s0 + $0x28] sm:$0xff]
  %v47 = vld [vmem:[%s0 + $0x30] sm:$0xff]
  %v48 = vld [vmem:[%s0 + $0x38] sm:$0xff]
  %v49 = vld [vmem:[%s2] sm:$0xff]
  %v50 = vld [vmem:[%s2 + $0x8] sm:$0xff]
  %v51 = vld [vmem:[%s2 + $0x10] sm:$0xff]
  %v52 = vld [vmem:[%s2 + $0x18] sm:$0xff]
  %v53 = vld [vmem:[%s3] sm:$0x1]
  %v55 = vlaneseq
  %v56 = vshrl.u32 %v55, 7
  %v57 = vsub.s32 0, %v56
  %v58 = vrot.slane %v53, %v57
  %vm60 = vcmask 261120
  %v62 = vsel %vm60, %v41, 0
  %v65 = vsel %vm60, %v42, 0
  %v68 = vsel %vm60, %v43, 0
  %v71 = vsel %vm60, %v44, 0
  %v74 = vsel %vm60, %v45, 0
  %v77 = vsel %vm60, %v46, 0
  %v80 = vsel %vm60, %v47, 0
  %v83 = vsel %vm60, %v48, 0
  %85 = vmatprep.subr.mxu0 0.0
  %86 = vmatpush1.msra.mxu0 %v49
  %87 = vmatprep.subr.mxu0 0.0
  %88 = vmatpush1.msra.mxu0 %v50
  %89 = vmatprep.subr.mxu0 0.0
  %90 = vmatpush1.msra.mxu0 %v51
  %91 = vmatprep.subr.mxu0 0.0
  %92 = vmatpush1.msra.mxu0 %v52
  %93 = vmatprep.subr.mxu0 0.0
  %94 = vmatpush1.msra.mxu0 0.0
  %95 = vmatprep.subr.mxu0 0.0
  %96 = vmatpush1.msra.mxu0 0.0
  %97 = vmatprep.subr.mxu0 0.0
  %98 = vmatpush1.msra.mxu0 0.0
  %99 = vmatprep.subr.mxu0 0.0
  %100 = vmatpush1.msra.mxu0 0.0
  %101 = vmatprep.subr.mxu0 0.0
  %102 = vmatpush1.msra.mxu0 0.0
  %103 = vmatprep.subr.mxu0 0.0
  %104 = vmatpush1.msra.mxu0 0.0
  %105 = vmatprep.subr.mxu0 0.0
  %106 = vmatpush1.msra.mxu0 0.0
  %107 = vmatprep.subr.mxu0 0.0
  %108 = vmatpush1.msra.mxu0 0.0
  %109 = vmatprep.subr.mxu0 0.0
  %110 = vmatpush1.msra.mxu0 0.0
  %111 = vmatprep.subr.mxu0 0.0
  %112 = vmatpush1.msra.mxu0 0.0
  %113 = vmatprep.subr.mxu0 0.0
  %114 = vmatpush1.msra.mxu0 0.0
  %115 = vmatprep.subr.mxu0 0.0
  %116 = vmatpush1.msra.mxu0 0.0
  %117 = vmatprep.subr.mxu0 0.0
  %118 = vmatpush1.msra.mxu0 0.0
  %119 = vmatprep.subr.mxu0 0.0
  %120 = vmatpush1.msra.mxu0 0.0
  %121 = vmatprep.subr.mxu0 0.0
  %122 = vmatpush1.msra.mxu0 0.0
  %123 = vmatprep.subr.mxu0 0.0
  %124 = vmatpush1.msra.mxu0 0.0
  %125 = vmatprep.subr.mxu0 0.0
  %126 = vmatpush1.msra.mxu0 0.0
  %127 = vmatprep.subr.mxu0 0.0
  %128 = vmatpush1.msra.mxu0 0.0
  %129 = vmatprep.subr.mxu0 0.0
  %130 = vmatpush1.msra.mxu0 0.0
  %131 = vmatprep.subr.mxu0 0.0
  %132 = vmatpush1.msra.mxu0 0.0
  %133 = vmatprep.subr.mxu0 0.0
  %134 = vmatpush1.msra.mxu0 0.0
  %135 = vmatprep.subr.mxu0 0.0
  %136 = vmatpush1.msra.mxu0 0.0
  %137 = vmatprep.subr.mxu0 0.0
  %138 = vmatpush1.msra.mxu0 0.0
  %139 = vmatprep.subr.mxu0 0.0
  %140 = vmatpush1.msra.mxu0 0.0
  %141 = vmatprep.subr.mxu0 0.0
  %142 = vmatpush1.msra.mxu0 0.0
  %143 = vmatprep.subr.mxu0 0.0
  %144 = vmatpush1.msra.mxu0 0.0
  %145 = vmatprep.subr.mxu0 0.0
  %146 = vmatpush1.msra.mxu0 0.0
  %147 = vmatprep.subr.mxu0 0.0
  %148 = vmatpush1.msra.mxu0 0.0
  %149 = vmatprep.mubr.f32.mxu0 0.0
  %150 = vmatmul.mubr.f32.gmra.mrb[0].mxu0 %v62
  %v151 = vpop.f32.mrb[0].mxu0
  %v152 = vadd.f32 %v58, %v151
  %v153 = vpop.f32.mrb[0].mxu0
  %154 = vmatprep.mubr.f32.mxu0 0.0
  %155 = vmatmul.mubr.f32.gmra.mrb[0].mxu0 %v65
  %v156 = vpop.f32.mrb[0].mxu0
  %v157 = vadd.f32 %v58, %v156
  %v158 = vpop.f32.mrb[0].mxu0
  %159 = vmatprep.mubr.f32.mxu0 0.0
  %160 = vmatmul.mubr.f32.gmra.mrb[0].mxu0 %v68
  %v161 = vpop.f32.mrb[0].mxu0
  %v162 = vadd.f32 %v58, %v161
  %v163 = vpop.f32.mrb[0].mxu0
  %164 = vmatprep.mubr.f32.mxu0 0.0
  %165 = vmatmul.mubr.f32.gmra.mrb[0].mxu0 %v71
  %v166 = vpop.f32.mrb[0].mxu0
  %v167 = vadd.f32 %v58, %v166
  %v168 = vpop.f32.mrb[0].mxu0
  %169 = vmatprep.mubr.f32.mxu0 0.0
  %170 = vmatmul.mubr.f32.gmra.mrb[0].mxu0 %v74
  %v171 = vpop.f32.mrb[0].mxu0
  %v172 = vadd.f32 %v58, %v171
  %v173 = vpop.f32.mrb[0].mxu0
  %174 = vmatprep.mubr.f32.mxu0 0.0
  %175 = vmatmul.mubr.f32.gmra.mrb[0].mxu0 %v77
  %v176 = vpop.f32.mrb[0].mxu0
  %v177 = vadd.f32 %v58, %v176
  %v178 = vpop.f32.mrb[0].mxu0
  %179 = vmatprep.mubr.f32.mxu0 0.0
  %180 = vmatmul.mubr.f32.gmra.mrb[0].mxu0 %v80
  %v181 = vpop.f32.mrb[0].mxu0
  %v182 = vadd.f32 %v58, %v181
  %v183 = vpop.f32.mrb[0].mxu0
  %184 = vmatprep.mubr.f32.mxu0 0.0
  %185 = vmatmul.mubr.f32.gmra.mrb[0].mxu0 %v83
  %v186 = vpop.f32.mrb[0].mxu0
  %v187 = vadd.f32 %v58, %v186
  %v188 = vpop.f32.mrb[0].mxu0
  %189 = vdwg.mxu0
  %v190 = vld [vmem:[%s4] sm:$0xff]
  %v191 = vld [vmem:[%s4 + $0x8] sm:$0xff]
  %v192 = vld [vmem:[%s4 + $0x10] sm:$0xff]
  %v193 = vld [vmem:[%s4 + $0x18] sm:$0xff]
  %v194 = vld [vmem:[%s4 + $0x20] sm:$0xff]
  %v195 = vld [vmem:[%s4 + $0x28] sm:$0xff]
  %v196 = vld [vmem:[%s4 + $0x30] sm:$0xff]
  %v197 = vld [vmem:[%s4 + $0x38] sm:$0xff]
  %v198 = vld [vmem:[%s4 + $0x40] sm:$0xff]
  %v199 = vld [vmem:[%s4 + $0x48] sm:$0xff]
  %v200 = vld [vmem:[%s4 + $0x50] sm:$0xff]
  %v201 = vld [vmem:[%s4 + $0x58] sm:$0xff]
  %v202 = vld [vmem:[%s4 + $0x60] sm:$0xff]
  %v203 = vld [vmem:[%s4 + $0x68] sm:$0xff]
  %v204 = vld [vmem:[%s4 + $0x70] sm:$0xff]
  %v205 = vld [vmem:[%s4 + $0x78] sm:$0xff]
  %206 = vmatprep.subr.mxu0 0.0
  %207 = vmatpush1.msra.mxu0 %v190
  %208 = vmatprep.subr.mxu0 0.0
  %209 = vmatpush1.msra.mxu0 %v191
  %210 = vmatprep.subr.mxu0 0.0
  %211 = vmatpush1.msra.mxu0 %v192
  %212 = vmatprep.subr.mxu0 0.0
  %213 = vmatpush1.msra.mxu0 %v193
  %214 = vmatprep.subr.mxu0 0.0
  %215 = vmatpush1.msra.mxu0 %v194
  %216 = vmatprep.subr.mxu0 0.0
  %217 = vmatpush1.msra.mxu0 %v195
  %218 = vmatprep.subr.mxu0 0.0
  %219 = vmatpush1.msra.mxu0 %v196
  %220 = vmatprep.subr.mxu0 0.0
  %221 = vmatpush1.msra.mxu0 %v197
  %222 = vmatprep.subr.mxu0 0.0
  %223 = vmatpush1.msra.mxu0 %v198
  %224 = vmatprep.subr.mxu0 0.0
  %225 = vmatpush1.msra.mxu0 %v199
  %226 = vmatprep.subr.mxu0 0.0
  %227 = vmatpush1.msra.mxu0 %v200
  %228 = vmatprep.subr.mxu0 0.0
  %229 = vmatpush1.msra.mxu0 %v201
  %230 = vmatprep.subr.mxu0 0.0
  %231 = vmatpush1.msra.mxu0 %v202
  %232 = vmatprep.subr.mxu0 0.0
  %233 = vmatpush1.msra.mxu0 %v203
  %234 = vmatprep.subr.mxu0 0.0
  %235 = vmatpush1.msra.mxu0 %v204
  %236 = vmatprep.subr.mxu0 0.0
  %237 = vmatpush1.msra.mxu0 %v205
  %238 = vmatprep.subr.mxu0 0.0
  %239 = vmatpush1.msra.mxu0 0.0
  %240 = vmatprep.subr.mxu0 0.0
  %241 = vmatpush1.msra.mxu0 0.0
  %242 = vmatprep.subr.mxu0 0.0
  %243 = vmatpush1.msra.mxu0 0.0
  %244 = vmatprep.subr.mxu0 0.0
  %245 = vmatpush1.msra.mxu0 0.0
  %246 = vmatprep.subr.mxu0 0.0
  %247 = vmatpush1.msra.mxu0 0.0
  %248 = vmatprep.subr.mxu0 0.0
  %249 = vmatpush1.msra.mxu0 0.0
  %250 = vmatprep.subr.mxu0 0.0
  %251 = vmatpush1.msra.mxu0 0.0
  %252 = vmatprep.subr.mxu0 0.0
  %253 = vmatpush1.msra.mxu0 0.0
  %254 = vmatprep.subr.mxu0 0.0
  %255 = vmatpush1.msra.mxu0 0.0
  %256 = vmatprep.subr.mxu0 0.0
  %257 = vmatpush1.msra.mxu0 0.0
  %258 = vmatprep.subr.mxu0 0.0
  %259 = vmatpush1.msra.mxu0 0.0
  %260 = vmatprep.subr.mxu0 0.0
  %261 = vmatpush1.msra.mxu0 0.0
  %262 = vmatprep.subr.mxu0 0.0
  %263 = vmatpush1.msra.mxu0 0.0
  %264 = vmatprep.subr.mxu0 0.0
  %265 = vmatpush1.msra.mxu0 0.0
  %266 = vmatprep.subr.mxu0 0.0
  %267 = vmatpush1.msra.mxu0 0.0
  %268 = vmatprep.subr.mxu0 0.0
  %269 = vmatpush1.msra.mxu0 0.0
  %270 = vmatprep.mubr.f32.mxu0 0.0
  %271 = vmatmul.mubr.f32.gmra.mrb[0].mxu0 %v152
  %v272 = vpop.f32.mrb[0].mxu0
  %v273 = vadd.f32 0.0, %v272
  %v274 = vpop.f32.mrb[0].mxu0
  %275 = vmatprep.mubr.f32.mxu0 0.0
  %276 = vmatmul.mubr.f32.gmra.mrb[0].mxu0 %v157
  %v277 = vpop.f32.mrb[0].mxu0
  %v278 = vadd.f32 0.0, %v277
  %v279 = vpop.f32.mrb[0].mxu0
  %280 = vmatprep.mubr.f32.mxu0 0.0
  %281 = vmatmul.mubr.f32.gmra.mrb[0].mxu0 %v162
  %v282 = vpop.f32.mrb[0].mxu0
  %v283 = vadd.f32 0.0, %v282
  %v284 = vpop.f32.mrb[0].mxu0
  %285 = vmatprep.mubr.f32.mxu0 0.0
  %286 = vmatmul.mubr.f32.gmra.mrb[0].mxu0 %v167
  %v287 = vpop.f32.mrb[0].mxu0
  %v288 = vadd.f32 0.0, %v287
  %v289 = vpop.f32.mrb[0].mxu0
  %290 = vmatprep.mubr.f32.mxu0 0.0
  %291 = vmatmul.mubr.f32.gmra.mrb[0].mxu0 %v172
  %v292 = vpop.f32.mrb[0].mxu0
  %v293 = vadd.f32 0.0, %v292
  %v294 = vpop.f32.mrb[0].mxu0
  %295 = vmatprep.mubr.f32.mxu0 0.0
  %296 = vmatmul.mubr.f32.gmra.mrb[0].mxu0 %v177
  %v297 = vpop.f32.mrb[0].mxu0
  %v298 = vadd.f32 0.0, %v297
  %v299 = vpop.f32.mrb[0].mxu0
  %300 = vmatprep.mubr.f32.mxu0 0.0
  %301 = vmatmul.mubr.f32.gmra.mrb[0].mxu0 %v182
  %v302 = vpop.f32.mrb[0].mxu0
  %v303 = vadd.f32 0.0, %v302
  %v304 = vpop.f32.mrb[0].mxu0
  %305 = vmatprep.mubr.f32.mxu0 0.0
  %306 = vmatmul.mubr.f32.gmra.mrb[0].mxu0 %v187
  %v307 = vpop.f32.mrb[0].mxu0
  %v308 = vadd.f32 0.0, %v307
  %v309 = vpop.f32.mrb[0].mxu0
  %310 = vdwg.mxu0
  %v311 = vld [vmem:[%s5] sm:$0xff]
  %v312 = vld [vmem:[%s5 + $0x8] sm:$0xff]
  %v313 = vld [vmem:[%s5 + $0x10] sm:$0xff]
  %v314 = vld [vmem:[%s5 + $0x18] sm:$0xff]
  %v315 = vld [vmem:[%s5 + $0x20] sm:$0xff]
  %v316 = vld [vmem:[%s5 + $0x28] sm:$0xff]
  %v317 = vld [vmem:[%s5 + $0x30] sm:$0xff]
  %v318 = vld [vmem:[%s5 + $0x38] sm:$0xff]
  %v319 = vld [vmem:[%s5 + $0x40] sm:$0xff]
  %v320 = vld [vmem:[%s5 + $0x48] sm:$0xff]
  %v321 = vld [vmem:[%s5 + $0x50] sm:$0xff]
  %v322 = vld [vmem:[%s5 + $0x58] sm:$0xff]
  %v323 = vld [vmem:[%s5 + $0x60] sm:$0xff]
  %v324 = vld [vmem:[%s5 + $0x68] sm:$0xff]
  %v325 = vld [vmem:[%s5 + $0x70] sm:$0xff]
  %v326 = vld [vmem:[%s5 + $0x78] sm:$0xff]
  %327 = vmatprep.subr.mxu0 0.0
  %328 = vmatpush1.msra.mxu0 %v311
  %329 = vmatprep.subr.mxu0 0.0
  %330 = vmatpush1.msra.mxu0 %v312
  %331 = vmatprep.subr.mxu0 0.0
  %332 = vmatpush1.msra.mxu0 %v313
  %333 = vmatprep.subr.mxu0 0.0
  %334 = vmatpush1.msra.mxu0 %v314
  %335 = vmatprep.subr.mxu0 0.0
  %336 = vmatpush1.msra.mxu0 %v315
  %337 = vmatprep.subr.mxu0 0.0
  %338 = vmatpush1.msra.mxu0 %v316
  %339 = vmatprep.subr.mxu0 0.0
  %340 = vmatpush1.msra.mxu0 %v317
  %341 = vmatprep.subr.mxu0 0.0
  %342 = vmatpush1.msra.mxu0 %v318
  %343 = vmatprep.subr.mxu0 0.0
  %344 = vmatpush1.msra.mxu0 %v319
  %345 = vmatprep.subr.mxu0 0.0
  %346 = vmatpush1.msra.mxu0 %v320
  %347 = vmatprep.subr.mxu0 0.0
  %348 = vmatpush1.msra.mxu0 %v321
  %349 = vmatprep.subr.mxu0 0.0
  %350 = vmatpush1.msra.mxu0 %v322
  %351 = vmatprep.subr.mxu0 0.0
  %352 = vmatpush1.msra.mxu0 %v323
  %353 = vmatprep.subr.mxu0 0.0
  %354 = vmatpush1.msra.mxu0 %v324
  %355 = vmatprep.subr.mxu0 0.0
  %356 = vmatpush1.msra.mxu0 %v325
  %357 = vmatprep.subr.mxu0 0.0
  %358 = vmatpush1.msra.mxu0 %v326
  %359 = vmatprep.subr.mxu0 0.0
  %360 = vmatpush1.msra.mxu0 0.0
  %361 = vmatprep.subr.mxu0 0.0
  %362 = vmatpush1.msra.mxu0 0.0
  %363 = vmatprep.subr.mxu0 0.0
  %364 = vmatpush1.msra.mxu0 0.0
  %365 = vmatprep.subr.mxu0 0.0
  %366 = vmatpush1.msra.mxu0 0.0
  %367 = vmatprep.subr.mxu0 0.0
  %368 = vmatpush1.msra.mxu0 0.0
  %369 = vmatprep.subr.mxu0 0.0
  %370 = vmatpush1.msra.mxu0 0.0
  %371 = vmatprep.subr.mxu0 0.0
  %372 = vmatpush1.msra.mxu0 0.0
  %373 = vmatprep.subr.mxu0 0.0
  %374 = vmatpush1.msra.mxu0 0.0
  %375 = vmatprep.subr.mxu0 0.0
  %376 = vmatpush1.msra.mxu0 0.0
  %377 = vmatprep.subr.mxu0 0.0
  %378 = vmatpush1.msra.mxu0 0.0
  %379 = vmatprep.subr.mxu0 0.0
  %380 = vmatpush1.msra.mxu0 0.0
  %381 = vmatprep.subr.mxu0 0.0
  %382 = vmatpush1.msra.mxu0 0.0
  %383 = vmatprep.subr.mxu0 0.0
  %384 = vmatpush1.msra.mxu0 0.0
  %385 = vmatprep.subr.mxu0 0.0
  %386 = vmatpush1.msra.mxu0 0.0
  %387 = vmatprep.subr.mxu0 0.0
  %388 = vmatpush1.msra.mxu0 0.0
  %389 = vmatprep.subr.mxu0 0.0
  %390 = vmatpush1.msra.mxu0 0.0
  %391 = vmatprep.mubr.f32.mxu0 0.0
  %392 = vmatmul.mubr.f32.gmra.mrb[0].mxu0 %v152
  %v393 = vpop.f32.mrb[0].mxu0
  %v394 = vadd.f32 0.0, %v393
  %v395 = vpop.f32.mrb[0].mxu0
  %396 = vmatprep.mubr.f32.mxu0 0.0
  %397 = vmatmul.mubr.f32.gmra.mrb[0].mxu0 %v157
  %v398 = vpop.f32.mrb[0].mxu0
  %v399 = vadd.f32 0.0, %v398
  %v400 = vpop.f32.mrb[0].mxu0
  %401 = vmatprep.mubr.f32.mxu0 0.0
  %402 = vmatmul.mubr.f32.gmra.mrb[0].mxu0 %v162
  %v403 = vpop.f32.mrb[0].mxu0
  %v404 = vadd.f32 0.0, %v403
  %v405 = vpop.f32.mrb[0].mxu0
  %406 = vmatprep.mubr.f32.mxu0 0.0
  %407 = vmatmul.mubr.f32.gmra.mrb[0].mxu0 %v167
  %v408 = vpop.f32.mrb[0].mxu0
  %v409 = vadd.f32 0.0, %v408
  %v410 = vpop.f32.mrb[0].mxu0
  %411 = vmatprep.mubr.f32.mxu0 0.0
  %412 = vmatmul.mubr.f32.gmra.mrb[0].mxu0 %v172
  %v413 = vpop.f32.mrb[0].mxu0
  %v414 = vadd.f32 0.0, %v413
  %v415 = vpop.f32.mrb[0].mxu0
  %416 = vmatprep.mubr.f32.mxu0 0.0
  %417 = vmatmul.mubr.f32.gmra.mrb[0].mxu0 %v177
  %v418 = vpop.f32.mrb[0].mxu0
  %v419 = vadd.f32 0.0, %v418
  %v420 = vpop.f32.mrb[0].mxu0
  %421 = vmatprep.mubr.f32.mxu0 0.0
  %422 = vmatmul.mubr.f32.gmra.mrb[0].mxu0 %v182
  %v423 = vpop.f32.mrb[0].mxu0
  %v424 = vadd.f32 0.0, %v423
  %v425 = vpop.f32.mrb[0].mxu0
  %426 = vmatprep.mubr.f32.mxu0 0.0
  %427 = vmatmul.mubr.f32.gmra.mrb[0].mxu0 %v187
  %v428 = vpop.f32.mrb[0].mxu0
  %v429 = vadd.f32 0.0, %v428
  %v430 = vpop.f32.mrb[0].mxu0
  %431 = vdwg.mxu0
  %v432 = vrcp.pop %v394
  %v433 = vrcp.pop %v399
  %v434 = vrcp.pop %v404
  %v435 = vrcp.pop %v409
  %v436 = vrcp.pop %v414
  %v437 = vrcp.pop %v419
  %v438 = vrcp.pop %v424
  %v439 = vrcp.pop %v429
  %v440 = vmul.f32 %v394, %v432
  %v441 = vmul.f32 %v399, %v433
  %v442 = vmul.f32 %v404, %v434
  %v443 = vmul.f32 %v409, %v435
  %v444 = vmul.f32 %v414, %v436
  %v445 = vmul.f32 %v419, %v437
  %v446 = vmul.f32 %v424, %v438
  %v447 = vmul.f32 %v429, %v439
  %v448 = vsub.f32 2.0, %v440
  %v449 = vsub.f32 2.0, %v441
  %v450 = vsub.f32 2.0, %v442
  %v451 = vsub.f32 2.0, %v443
  %v452 = vsub.f32 2.0, %v444
  %v453 = vsub.f32 2.0, %v445
  %v454 = vsub.f32 2.0, %v446
  %v455 = vsub.f32 2.0, %v447
  %v456 = vmul.f32 %v432, %v448
  %v457 = vmul.f32 %v433, %v449
  %v458 = vmul.f32 %v434, %v450
  %v459 = vmul.f32 %v435, %v451
  %v460 = vmul.f32 %v436, %v452
  %v461 = vmul.f32 %v437, %v453
  %v462 = vmul.f32 %v438, %v454
  %v463 = vmul.f32 %v439, %v455
  %v464 = vmul.f32 %v273, %v456
  %v465 = vmul.f32 %v278, %v457
  %v466 = vmul.f32 %v283, %v458
  %v467 = vmul.f32 %v288, %v459
  %v468 = vmul.f32 %v293, %v460
  %v469 = vmul.f32 %v298, %v461
  %v470 = vmul.f32 %v303, %v462
  %v471 = vmul.f32 %v308, %v463
  %v472 = vld [vmem:[%s7] sm:$0xff]
  %v473 = vld [vmem:[%s7 + $0x8] sm:$0xff]
  %v474 = vld [vmem:[%s7 + $0x10] sm:$0xff]
  %v475 = vld [vmem:[%s7 + $0x18] sm:$0xff]
  %v476 = vld [vmem:[%s7 + $0x20] sm:$0xff]
  %v477 = vld [vmem:[%s7 + $0x28] sm:$0xff]
  %v478 = vld [vmem:[%s7 + $0x30] sm:$0xff]
  %v479 = vld [vmem:[%s7 + $0x38] sm:$0xff]
  %v480 = vld [vmem:[%s6] sm:$0xff]
  %v481 = vld [vmem:[%s6 + $0x8] sm:$0xff]
  %v482 = vld [vmem:[%s6 + $0x10] sm:$0xff]
  %v483 = vld [vmem:[%s6 + $0x18] sm:$0xff]
  %v484 = vld [vmem:[%s6 + $0x20] sm:$0xff]
  %v485 = vld [vmem:[%s6 + $0x28] sm:$0xff]
  %v486 = vld [vmem:[%s6 + $0x30] sm:$0xff]
  %v487 = vld [vmem:[%s6 + $0x38] sm:$0xff]
  %vm488 = vcmask 523264
  %v490 = vsel %vm488, %v472, 0
  %v493 = vsel %vm488, %v473, 0
  %v496 = vsel %vm488, %v474, 0
  %v499 = vsel %vm488, %v475, 0
  %v502 = vsel %vm488, %v476, 0
  %v505 = vsel %vm488, %v477, 0
  %v508 = vsel %vm488, %v478, 0
  %v511 = vsel %vm488, %v479, 0
  %513 = vmatprep.subr.mxu0 0.0
  %514 = vmatpush1.msra.mxu0 %v480
  %515 = vmatprep.subr.mxu0 0.0
  %516 = vmatpush1.msra.mxu0 %v481
  %517 = vmatprep.subr.mxu0 0.0
  %518 = vmatpush1.msra.mxu0 %v482
  %519 = vmatprep.subr.mxu0 0.0
  %520 = vmatpush1.msra.mxu0 %v483
  %521 = vmatprep.subr.mxu0 0.0
  %522 = vmatpush1.msra.mxu0 %v484
  %523 = vmatprep.subr.mxu0 0.0
  %524 = vmatpush1.msra.mxu0 %v485
  %525 = vmatprep.subr.mxu0 0.0
  %526 = vmatpush1.msra.mxu0 %v486
  %527 = vmatprep.subr.mxu0 0.0
  %528 = vmatpush1.msra.mxu0 %v487
  %529 = vmatprep.subr.mxu0 0.0
  %530 = vmatpush1.msra.mxu0 0.0
  %531 = vmatprep.subr.mxu0 0.0
  %532 = vmatpush1.msra.mxu0 0.0
  %533 = vmatprep.subr.mxu0 0.0
  %534 = vmatpush1.msra.mxu0 0.0
  %535 = vmatprep.subr.mxu0 0.0
  %536 = vmatpush1.msra.mxu0 0.0
  %537 = vmatprep.subr.mxu0 0.0
  %538 = vmatpush1.msra.mxu0 0.0
  %539 = vmatprep.subr.mxu0 0.0
  %540 = vmatpush1.msra.mxu0 0.0
  %541 = vmatprep.subr.mxu0 0.0
  %542 = vmatpush1.msra.mxu0 0.0
  %543 = vmatprep.subr.mxu0 0.0
  %544 = vmatpush1.msra.mxu0 0.0
  %545 = vmatprep.subr.mxu0 0.0
  %546 = vmatpush1.msra.mxu0 0.0
  %547 = vmatprep.subr.mxu0 0.0
  %548 = vmatpush1.msra.mxu0 0.0
  %549 = vmatprep.subr.mxu0 0.0
  %550 = vmatpush1.msra.mxu0 0.0
  %551 = vmatprep.subr.mxu0 0.0
  %552 = vmatpush1.msra.mxu0 0.0
  %553 = vmatprep.subr.mxu0 0.0
  %554 = vmatpush1.msra.mxu0 0.0
  %555 = vmatprep.subr.mxu0 0.0
  %556 = vmatpush1.msra.mxu0 0.0
  %557 = vmatprep.subr.mxu0 0.0
  %558 = vmatpush1.msra.mxu0 0.0
  %559 = vmatprep.subr.mxu0 0.0
  %560 = vmatpush1.msra.mxu0 0.0
  %561 = vmatprep.subr.mxu0 0.0
  %562 = vmatpush1.msra.mxu0 0.0
  %563 = vmatprep.subr.mxu0 0.0
  %564 = vmatpush1.msra.mxu0 0.0
  %565 = vmatprep.subr.mxu0 0.0
  %566 = vmatpush1.msra.mxu0 0.0
  %567 = vmatprep.subr.mxu0 0.0
  %568 = vmatpush1.msra.mxu0 0.0
  %569 = vmatprep.subr.mxu0 0.0
  %570 = vmatpush1.msra.mxu0 0.0
  %571 = vmatprep.subr.mxu0 0.0
  %572 = vmatpush1.msra.mxu0 0.0
  %573 = vmatprep.subr.mxu0 0.0
  %574 = vmatpush1.msra.mxu0 0.0
  %575 = vmatprep.subr.mxu0 0.0
  %576 = vmatpush1.msra.mxu0 0.0
  %577 = vmatprep.mubr.f32.mxu0 0.0
  %578 = vmatmul.mubr.f32.gmra.mrb[0].mxu0 %v490
  %v579 = vpop.f32.mrb[0].mxu0
  %v580 = vadd.f32 0.0, %v579
  %v581 = vpop.f32.mrb[0].mxu0
  %582 = vmatprep.mubr.f32.mxu0 0.0
  %583 = vmatmul.mubr.f32.gmra.mrb[0].mxu0 %v493
  %v584 = vpop.f32.mrb[0].mxu0
  %v585 = vadd.f32 0.0, %v584
  %v586 = vpop.f32.mrb[0].mxu0
  %587 = vmatprep.mubr.f32.mxu0 0.0
  %588 = vmatmul.mubr.f32.gmra.mrb[0].mxu0 %v496
  %v589 = vpop.f32.mrb[0].mxu0
  %v590 = vadd.f32 0.0, %v589
  %v591 = vpop.f32.mrb[0].mxu0
  %592 = vmatprep.mubr.f32.mxu0 0.0
  %593 = vmatmul.mubr.f32.gmra.mrb[0].mxu0 %v499
  %v594 = vpop.f32.mrb[0].mxu0
  %v595 = vadd.f32 0.0, %v594
  %v596 = vpop.f32.mrb[0].mxu0
  %597 = vmatprep.mubr.f32.mxu0 0.0
  %598 = vmatmul.mubr.f32.gmra.mrb[0].mxu0 %v502
  %v599 = vpop.f32.mrb[0].mxu0
  %v600 = vadd.f32 0.0, %v599
  %v601 = vpop.f32.mrb[0].mxu0
  %602 = vmatprep.mubr.f32.mxu0 0.0
  %603 = vmatmul.mubr.f32.gmra.mrb[0].mxu0 %v505
  %v604 = vpop.f32.mrb[0].mxu0
  %v605 = vadd.f32 0.0, %v604
  %v606 = vpop.f32.mrb[0].mxu0
  %607 = vmatprep.mubr.f32.mxu0 0.0
  %608 = vmatmul.mubr.f32.gmra.mrb[0].mxu0 %v508
  %v609 = vpop.f32.mrb[0].mxu0
  %v610 = vadd.f32 0.0, %v609
  %v611 = vpop.f32.mrb[0].mxu0
  %612 = vmatprep.mubr.f32.mxu0 0.0
  %613 = vmatmul.mubr.f32.gmra.mrb[0].mxu0 %v511
  %v614 = vpop.f32.mrb[0].mxu0
  %v615 = vadd.f32 0.0, %v614
  %v616 = vpop.f32.mrb[0].mxu0
  %617 = vdwg.mxu0
  %v618 = vmul.f32 %v464, 0.5
  %v619 = vmul.f32 %v465, 0.5
  %v620 = vmul.f32 %v466, 0.5
  %v621 = vmul.f32 %v467, 0.5
  %v622 = vmul.f32 %v468, 0.5
  %v623 = vmul.f32 %v469, 0.5
  %v624 = vmul.f32 %v470, 0.5
  %v625 = vmul.f32 %v471, 0.5
  %v626 = vmul.f32 %v580, 0.5
  %v627 = vmul.f32 %v585, 0.5
  %v628 = vmul.f32 %v590, 0.5
  %v629 = vmul.f32 %v595, 0.5
  %v630 = vmul.f32 %v600, 0.5
  %v631 = vmul.f32 %v605, 0.5
  %v632 = vmul.f32 %v610, 0.5
  %v633 = vmul.f32 %v615, 0.5
  %v634 = vadd.f32 %v618, %v626
  %v635 = vadd.f32 %v619, %v627
  %v636 = vadd.f32 %v620, %v628
  %v637 = vadd.f32 %v621, %v629
  %v638 = vadd.f32 %v622, %v630
  %v639 = vadd.f32 %v623, %v631
  %v640 = vadd.f32 %v624, %v632
  %v641 = vadd.f32 %v625, %v633
  %v642 = vld [vmem:[%s1] sm:$0xff]
  %v643 = vld [vmem:[%s1 + $0x8] sm:$0xff]
  %v644 = vld [vmem:[%s1 + $0x10] sm:$0xff]
  %v645 = vld [vmem:[%s1 + $0x18] sm:$0xff]
  %v646 = vld [vmem:[%s1 + $0x20] sm:$0xff]
  %v647 = vld [vmem:[%s1 + $0x28] sm:$0xff]
  %v648 = vld [vmem:[%s1 + $0x30] sm:$0xff]
  %v649 = vld [vmem:[%s1 + $0x38] sm:$0xff]
  %v650 = vmul.f32 %v642, 0.5
  %v651 = vmul.f32 %v643, 0.5
  %v652 = vmul.f32 %v644, 0.5
  %v653 = vmul.f32 %v645, 0.5
  %v654 = vmul.f32 %v646, 0.5
  %v655 = vmul.f32 %v647, 0.5
  %v656 = vmul.f32 %v648, 0.5
  %v657 = vmul.f32 %v649, 0.5
  %v658 = vmul.f32 %v41, 0.5
  %v659 = vmul.f32 %v42, 0.5
  %v660 = vmul.f32 %v43, 0.5
  %v661 = vmul.f32 %v44, 0.5
  %v662 = vmul.f32 %v45, 0.5
  %v663 = vmul.f32 %v46, 0.5
  %v664 = vmul.f32 %v47, 0.5
  %v665 = vmul.f32 %v48, 0.5
  %v666 = vadd.f32 %v650, %v658
  %v667 = vadd.f32 %v651, %v659
  %v668 = vadd.f32 %v652, %v660
  %v669 = vadd.f32 %v653, %v661
  %v670 = vadd.f32 %v654, %v662
  %v671 = vadd.f32 %v655, %v663
  %v672 = vadd.f32 %v656, %v664
  %v673 = vadd.f32 %v657, %v665
  %v674 = vld [vmem:[%s8] sm:$0xff]
  %v675 = vld [vmem:[%s8 + $0x8] sm:$0xff]
  %v676 = vld [vmem:[%s8 + $0x10] sm:$0xff]
  %v677 = vld [vmem:[%s8 + $0x18] sm:$0xff]
  %v678 = vld [vmem:[%s8 + $0x20] sm:$0xff]
  %v679 = vld [vmem:[%s8 + $0x28] sm:$0xff]
  %v680 = vld [vmem:[%s8 + $0x30] sm:$0xff]
  %v681 = vld [vmem:[%s8 + $0x38] sm:$0xff]
  %v682 = vld [vmem:[%s8 + $0x40] sm:$0xff]
  %v683 = vld [vmem:[%s8 + $0x48] sm:$0xff]
  %v684 = vld [vmem:[%s8 + $0x50] sm:$0xff]
  %v685 = vld [vmem:[%s8 + $0x58] sm:$0xff]
  %v686 = vld [vmem:[%s8 + $0x60] sm:$0xff]
  %v687 = vld [vmem:[%s8 + $0x68] sm:$0xff]
  %v688 = vld [vmem:[%s8 + $0x70] sm:$0xff]
  %v689 = vld [vmem:[%s8 + $0x78] sm:$0xff]
  %v690 = vld [vmem:[%s9] sm:$0xff]
  %v691 = vld [vmem:[%s9 + $0x8] sm:$0xff]
  %v692 = vld [vmem:[%s9 + $0x10] sm:$0xff]
  %v693 = vld [vmem:[%s9 + $0x18] sm:$0xff]
  %v695 = vsel %vm60, %v666, 0
  %v698 = vsel %vm60, %v667, 0
  %v701 = vsel %vm60, %v668, 0
  %v704 = vsel %vm60, %v669, 0
  %v707 = vsel %vm60, %v670, 0
  %v710 = vsel %vm60, %v671, 0
  %v713 = vsel %vm60, %v672, 0
  %v716 = vsel %vm60, %v673, 0
  %718 = vmatprep.subr.mxu0 0.0
  %719 = vmatpush1.msra.mxu0 %v690
  %720 = vmatprep.subr.mxu0 0.0
  %721 = vmatpush1.msra.mxu0 %v691
  %722 = vmatprep.subr.mxu0 0.0
  %723 = vmatpush1.msra.mxu0 %v692
  %724 = vmatprep.subr.mxu0 0.0
  %725 = vmatpush1.msra.mxu0 %v693
  %726 = vmatprep.subr.mxu0 0.0
  %727 = vmatpush1.msra.mxu0 0.0
  %728 = vmatprep.subr.mxu0 0.0
  %729 = vmatpush1.msra.mxu0 0.0
  %730 = vmatprep.subr.mxu0 0.0
  %731 = vmatpush1.msra.mxu0 0.0
  %732 = vmatprep.subr.mxu0 0.0
  %733 = vmatpush1.msra.mxu0 0.0
  %734 = vmatprep.subr.mxu0 0.0
  %735 = vmatpush1.msra.mxu0 0.0
  %736 = vmatprep.subr.mxu0 0.0
  %737 = vmatpush1.msra.mxu0 0.0
  %738 = vmatprep.subr.mxu0 0.0
  %739 = vmatpush1.msra.mxu0 0.0
  %740 = vmatprep.subr.mxu0 0.0
  %741 = vmatpush1.msra.mxu0 0.0
  %742 = vmatprep.subr.mxu0 0.0
  %743 = vmatpush1.msra.mxu0 0.0
  %744 = vmatprep.subr.mxu0 0.0
  %745 = vmatpush1.msra.mxu0 0.0
  %746 = vmatprep.subr.mxu0 0.0
  %747 = vmatpush1.msra.mxu0 0.0
  %748 = vmatprep.subr.mxu0 0.0
  %749 = vmatpush1.msra.mxu0 0.0
  %750 = vmatprep.subr.mxu0 0.0
  %751 = vmatpush1.msra.mxu0 0.0
  %752 = vmatprep.subr.mxu0 0.0
  %753 = vmatpush1.msra.mxu0 0.0
  %754 = vmatprep.subr.mxu0 0.0
  %755 = vmatpush1.msra.mxu0 0.0
  %756 = vmatprep.subr.mxu0 0.0
  %757 = vmatpush1.msra.mxu0 0.0
  %758 = vmatprep.subr.mxu0 0.0
  %759 = vmatpush1.msra.mxu0 0.0
  %760 = vmatprep.subr.mxu0 0.0
  %761 = vmatpush1.msra.mxu0 0.0
  %762 = vmatprep.subr.mxu0 0.0
  %763 = vmatpush1.msra.mxu0 0.0
  %764 = vmatprep.subr.mxu0 0.0
  %765 = vmatpush1.msra.mxu0 0.0
  %766 = vmatprep.subr.mxu0 0.0
  %767 = vmatpush1.msra.mxu0 0.0
  %768 = vmatprep.subr.mxu0 0.0
  %769 = vmatpush1.msra.mxu0 0.0
  %770 = vmatprep.subr.mxu0 0.0
  %771 = vmatpush1.msra.mxu0 0.0
  %772 = vmatprep.subr.mxu0 0.0
  %773 = vmatpush1.msra.mxu0 0.0
  %774 = vmatprep.subr.mxu0 0.0
  %775 = vmatpush1.msra.mxu0 0.0
  %776 = vmatprep.subr.mxu0 0.0
  %777 = vmatpush1.msra.mxu0 0.0
  %778 = vmatprep.subr.mxu0 0.0
  %779 = vmatpush1.msra.mxu0 0.0
  %780 = vmatprep.subr.mxu0 0.0
  %781 = vmatpush1.msra.mxu0 0.0
  %782 = vmatprep.mubr.f32.mxu0 0.0
  %783 = vmatmul.mubr.f32.gmra.mrb[0].mxu0 %v695
  %v784 = vpop.f32.mrb[0].mxu0
  %v785 = vadd.f32 0.0, %v784
  %v786 = vpop.f32.mrb[0].mxu0
  %787 = vmatprep.mubr.f32.mxu0 0.0
  %788 = vmatmul.mubr.f32.gmra.mrb[0].mxu0 %v698
  %v789 = vpop.f32.mrb[0].mxu0
  %v790 = vadd.f32 0.0, %v789
  %v791 = vpop.f32.mrb[0].mxu0
  %792 = vmatprep.mubr.f32.mxu0 0.0
  %793 = vmatmul.mubr.f32.gmra.mrb[0].mxu0 %v701
  %v794 = vpop.f32.mrb[0].mxu0
  %v795 = vadd.f32 0.0, %v794
  %v796 = vpop.f32.mrb[0].mxu0
  %797 = vmatprep.mubr.f32.mxu0 0.0
  %798 = vmatmul.mubr.f32.gmra.mrb[0].mxu0 %v704
  %v799 = vpop.f32.mrb[0].mxu0
  %v800 = vadd.f32 0.0, %v799
  %v801 = vpop.f32.mrb[0].mxu0
  %802 = vmatprep.mubr.f32.mxu0 0.0
  %803 = vmatmul.mubr.f32.gmra.mrb[0].mxu0 %v707
  %v804 = vpop.f32.mrb[0].mxu0
  %v805 = vadd.f32 0.0, %v804
  %v806 = vpop.f32.mrb[0].mxu0
  %807 = vmatprep.mubr.f32.mxu0 0.0
  %808 = vmatmul.mubr.f32.gmra.mrb[0].mxu0 %v710
  %v809 = vpop.f32.mrb[0].mxu0
  %v810 = vadd.f32 0.0, %v809
  %v811 = vpop.f32.mrb[0].mxu0
  %812 = vmatprep.mubr.f32.mxu0 0.0
  %813 = vmatmul.mubr.f32.gmra.mrb[0].mxu0 %v713
  %v814 = vpop.f32.mrb[0].mxu0
  %v815 = vadd.f32 0.0, %v814
  %v816 = vpop.f32.mrb[0].mxu0
  %817 = vmatprep.mubr.f32.mxu0 0.0
  %818 = vmatmul.mubr.f32.gmra.mrb[0].mxu0 %v716
  %v819 = vpop.f32.mrb[0].mxu0
  %v820 = vadd.f32 0.0, %v819
  %v821 = vpop.f32.mrb[0].mxu0
  %822 = vdwg.mxu0
  %823 = vmatprep.subr.mxu0 0.0
  %824 = vmatpush1.msra.mxu0 %v674
  %825 = vmatprep.subr.mxu0 0.0
  %826 = vmatpush1.msra.mxu0 %v675
  %827 = vmatprep.subr.mxu0 0.0
  %828 = vmatpush1.msra.mxu0 %v676
  %829 = vmatprep.subr.mxu0 0.0
  %830 = vmatpush1.msra.mxu0 %v677
  %831 = vmatprep.subr.mxu0 0.0
  %832 = vmatpush1.msra.mxu0 %v678
  %833 = vmatprep.subr.mxu0 0.0
  %834 = vmatpush1.msra.mxu0 %v679
  %835 = vmatprep.subr.mxu0 0.0
  %836 = vmatpush1.msra.mxu0 %v680
  %837 = vmatprep.subr.mxu0 0.0
  %838 = vmatpush1.msra.mxu0 %v681
  %839 = vmatprep.subr.mxu0 0.0
  %840 = vmatpush1.msra.mxu0 %v682
  %841 = vmatprep.subr.mxu0 0.0
  %842 = vmatpush1.msra.mxu0 %v683
  %843 = vmatprep.subr.mxu0 0.0
  %844 = vmatpush1.msra.mxu0 %v684
  %845 = vmatprep.subr.mxu0 0.0
  %846 = vmatpush1.msra.mxu0 %v685
  %847 = vmatprep.subr.mxu0 0.0
  %848 = vmatpush1.msra.mxu0 %v686
  %849 = vmatprep.subr.mxu0 0.0
  %850 = vmatpush1.msra.mxu0 %v687
  %851 = vmatprep.subr.mxu0 0.0
  %852 = vmatpush1.msra.mxu0 %v688
  %853 = vmatprep.subr.mxu0 0.0
  %854 = vmatpush1.msra.mxu0 %v689
  %855 = vmatprep.subr.mxu0 0.0
  %856 = vmatpush1.msra.mxu0 0.0
  %857 = vmatprep.subr.mxu0 0.0
  %858 = vmatpush1.msra.mxu0 0.0
  %859 = vmatprep.subr.mxu0 0.0
  %860 = vmatpush1.msra.mxu0 0.0
  %861 = vmatprep.subr.mxu0 0.0
  %862 = vmatpush1.msra.mxu0 0.0
  %863 = vmatprep.subr.mxu0 0.0
  %864 = vmatpush1.msra.mxu0 0.0
  %865 = vmatprep.subr.mxu0 0.0
  %866 = vmatpush1.msra.mxu0 0.0
  %867 = vmatprep.subr.mxu0 0.0
  %868 = vmatpush1.msra.mxu0 0.0
  %869 = vmatprep.subr.mxu0 0.0
  %870 = vmatpush1.msra.mxu0 0.0
  %871 = vmatprep.subr.mxu0 0.0
  %872 = vmatpush1.msra.mxu0 0.0
  %873 = vmatprep.subr.mxu0 0.0
  %874 = vmatpush1.msra.mxu0 0.0
  %875 = vmatprep.subr.mxu0 0.0
  %876 = vmatpush1.msra.mxu0 0.0
  %877 = vmatprep.subr.mxu0 0.0
  %878 = vmatpush1.msra.mxu0 0.0
  %879 = vmatprep.subr.mxu0 0.0
  %880 = vmatpush1.msra.mxu0 0.0
  %881 = vmatprep.subr.mxu0 0.0
  %882 = vmatpush1.msra.mxu0 0.0
  %883 = vmatprep.subr.mxu0 0.0
  %884 = vmatpush1.msra.mxu0 0.0
  %885 = vmatprep.subr.mxu0 0.0
  %886 = vmatpush1.msra.mxu0 0.0
  %887 = vmatprep.mubr.f32.mxu0 0.0
  %888 = vmatmul.mubr.f32.gmra.mrb[0].mxu0 %v634
  %v889 = vpop.f32.mrb[0].mxu0
  %v890 = vadd.f32 %v785, %v889
  %v891 = vpop.f32.mrb[0].mxu0
  %892 = vmatprep.mubr.f32.mxu0 0.0
  %893 = vmatmul.mubr.f32.gmra.mrb[0].mxu0 %v635
  %v894 = vpop.f32.mrb[0].mxu0
  %v895 = vadd.f32 %v790, %v894
  %v896 = vpop.f32.mrb[0].mxu0
  %897 = vmatprep.mubr.f32.mxu0 0.0
  %898 = vmatmul.mubr.f32.gmra.mrb[0].mxu0 %v636
  %v899 = vpop.f32.mrb[0].mxu0
  %v900 = vadd.f32 %v795, %v899
  %v901 = vpop.f32.mrb[0].mxu0
  %902 = vmatprep.mubr.f32.mxu0 0.0
  %903 = vmatmul.mubr.f32.gmra.mrb[0].mxu0 %v637
  %v904 = vpop.f32.mrb[0].mxu0
  %v905 = vadd.f32 %v800, %v904
  %v906 = vpop.f32.mrb[0].mxu0
  %907 = vmatprep.mubr.f32.mxu0 0.0
  %908 = vmatmul.mubr.f32.gmra.mrb[0].mxu0 %v638
  %v909 = vpop.f32.mrb[0].mxu0
  %v910 = vadd.f32 %v805, %v909
  %v911 = vpop.f32.mrb[0].mxu0
  %912 = vmatprep.mubr.f32.mxu0 0.0
  %913 = vmatmul.mubr.f32.gmra.mrb[0].mxu0 %v639
  %v914 = vpop.f32.mrb[0].mxu0
  %v915 = vadd.f32 %v810, %v914
  %v916 = vpop.f32.mrb[0].mxu0
  %917 = vmatprep.mubr.f32.mxu0 0.0
  %918 = vmatmul.mubr.f32.gmra.mrb[0].mxu0 %v640
  %v919 = vpop.f32.mrb[0].mxu0
  %v920 = vadd.f32 %v815, %v919
  %v921 = vpop.f32.mrb[0].mxu0
  %922 = vmatprep.mubr.f32.mxu0 0.0
  %923 = vmatmul.mubr.f32.gmra.mrb[0].mxu0 %v641
  %v924 = vpop.f32.mrb[0].mxu0
  %v925 = vadd.f32 %v820, %v924
  %v926 = vpop.f32.mrb[0].mxu0
  %927 = vdwg.mxu0
  %928 = vadd.xlane.f32.xlu0 %v890
  %v929 = vpop.xlane.xlu0 %928
  %930 = vadd.xlane.f32.xlu0 %v895
  %v931 = vpop.xlane.xlu0 %930
  %932 = vadd.xlane.f32.xlu0 %v900
  %v933 = vpop.xlane.xlu0 %932
  %934 = vadd.xlane.f32.xlu0 %v905
  %v935 = vpop.xlane.xlu0 %934
  %936 = vadd.xlane.f32.xlu0 %v910
  %v937 = vpop.xlane.xlu0 %936
  %938 = vadd.xlane.f32.xlu0 %v915
  %v939 = vpop.xlane.xlu0 %938
  %940 = vadd.xlane.f32.xlu0 %v920
  %v941 = vpop.xlane.xlu0 %940
  %942 = vadd.xlane.f32.xlu0 %v925
  %v943 = vpop.xlane.xlu0 %942
  %v944 = vrcp.pop 128.0
  %v945 = vmul.f32 %v929, %v944
  %v946 = vmul.f32 %v931, %v944
  %v947 = vmul.f32 %v933, %v944
  %v948 = vmul.f32 %v935, %v944
  %v949 = vmul.f32 %v937, %v944
  %v950 = vmul.f32 %v939, %v944
  %v951 = vmul.f32 %v941, %v944
  %v952 = vmul.f32 %v943, %v944
  %v953 = vsub.f32 %v890, %v945
  %v954 = vsub.f32 %v895, %v946
  %v955 = vsub.f32 %v900, %v947
  %v956 = vsub.f32 %v905, %v948
  %v957 = vsub.f32 %v910, %v949
  %v958 = vsub.f32 %v915, %v950
  %v959 = vsub.f32 %v920, %v951
  %v960 = vsub.f32 %v925, %v952
  %v961 = vmul.f32 %v953, %v953
  %v962 = vmul.f32 %v954, %v954
  %v963 = vmul.f32 %v955, %v955
  %v964 = vmul.f32 %v956, %v956
  %v965 = vmul.f32 %v957, %v957
  %v966 = vmul.f32 %v958, %v958
  %v967 = vmul.f32 %v959, %v959
  %v968 = vmul.f32 %v960, %v960
  %969 = vadd.xlane.f32.xlu0 %v961
  %v970 = vpop.xlane.xlu0 %969
  %971 = vadd.xlane.f32.xlu0 %v962
  %v972 = vpop.xlane.xlu0 %971
  %973 = vadd.xlane.f32.xlu0 %v963
  %v974 = vpop.xlane.xlu0 %973
  %975 = vadd.xlane.f32.xlu0 %v964
  %v976 = vpop.xlane.xlu0 %975
  %977 = vadd.xlane.f32.xlu0 %v965
  %v978 = vpop.xlane.xlu0 %977
  %979 = vadd.xlane.f32.xlu0 %v966
  %v980 = vpop.xlane.xlu0 %979
  %981 = vadd.xlane.f32.xlu0 %v967
  %v982 = vpop.xlane.xlu0 %981
  %983 = vadd.xlane.f32.xlu0 %v968
  %v984 = vpop.xlane.xlu0 %983
  %v985 = vmul.f32 %v970, %v944
  %v986 = vmul.f32 %v972, %v944
  %v987 = vmul.f32 %v974, %v944
  %v988 = vmul.f32 %v976, %v944
  %v989 = vmul.f32 %v978, %v944
  %v990 = vmul.f32 %v980, %v944
  %v991 = vmul.f32 %v982, %v944
  %v992 = vmul.f32 %v984, %v944
  %v993 = vadd.f32 %v985, 1e-05
  %v994 = vadd.f32 %v986, 1e-05
  %v995 = vadd.f32 %v987, 1e-05
  %v996 = vadd.f32 %v988, 1e-05
  %v997 = vadd.f32 %v989, 1e-05
  %v998 = vadd.f32 %v990, 1e-05
  %v999 = vadd.f32 %v991, 1e-05
  %v1000 = vadd.f32 %v992, 1e-05
  %v1001 = vrsqrt.pop %v993
  %v1002 = vrsqrt.pop %v994
  %v1003 = vrsqrt.pop %v995
  %v1004 = vrsqrt.pop %v996
  %v1005 = vrsqrt.pop %v997
  %v1006 = vrsqrt.pop %v998
  %v1007 = vrsqrt.pop %v999
  %v1008 = vrsqrt.pop %v1000
  %v1009 = vmul.f32 %v953, %v1001
  %v1010 = vmul.f32 %v954, %v1002
  %v1011 = vmul.f32 %v955, %v1003
  %v1012 = vmul.f32 %v956, %v1004
  %v1013 = vmul.f32 %v957, %v1005
  %v1014 = vmul.f32 %v958, %v1006
  %v1015 = vmul.f32 %v959, %v1007
  %v1016 = vmul.f32 %v960, %v1008
  %v1017 = vld [vmem:[%s10] sm:$0x1]
  %v1019 = vlaneseq
  %v1020 = vshrl.u32 %v1019, 7
  %v1021 = vsub.s32 0, %v1020
  %v1022 = vrot.slane %v1017, %v1021
  %v1024 = vmul.f32 %v1009, %v1022
  %v1025 = vmul.f32 %v1010, %v1022
  %v1026 = vmul.f32 %v1011, %v1022
  %v1027 = vmul.f32 %v1012, %v1022
  %v1028 = vmul.f32 %v1013, %v1022
  %v1029 = vmul.f32 %v1014, %v1022
  %v1030 = vmul.f32 %v1015, %v1022
  %v1031 = vmul.f32 %v1016, %v1022
  %v1032 = vld [vmem:[%s11] sm:$0x1]
  %v1034 = vlaneseq
  %v1035 = vshrl.u32 %v1034, 7
  %v1036 = vsub.s32 0, %v1035
  %v1037 = vrot.slane %v1032, %v1036
  %v1039 = vadd.f32 %v1024, %v1037
  %v1040 = vadd.f32 %v1025, %v1037
  %v1041 = vadd.f32 %v1026, %v1037
  %v1042 = vadd.f32 %v1027, %v1037
  %v1043 = vadd.f32 %v1028, %v1037
  %v1044 = vadd.f32 %v1029, %v1037
  %v1045 = vadd.f32 %v1030, %v1037
  %v1046 = vadd.f32 %v1031, %v1037
  %1047 = vst [vmem:[%s12] sm:$0xff] %v1039
  %1048 = vst [vmem:[%s12 + $0x8] sm:$0xff] %v1040
  %1049 = vst [vmem:[%s12 + $0x10] sm:$0xff] %v1041
  %1050 = vst [vmem:[%s12 + $0x18] sm:$0xff] %v1042
  %1051 = vst [vmem:[%s12 + $0x20] sm:$0xff] %v1043
  %1052 = vst [vmem:[%s12 + $0x28] sm:$0xff] %v1044
  %1053 = vst [vmem:[%s12 + $0x30] sm:$0xff] %v1045
  %1054 = vst [vmem:[%s12 + $0x38] sm:$0xff] %v1046
  // Predicated region
  $region50: #{difformer_forward.3} parent=0 // pred_check
    _
  $region51: #{difformer_forward.3} parent=0 // pred_check_branch
    %1056 = sbr.rel (0) target = $region53
  $region52: #{difformer_forward.3} parent=0 // pred_region
    _
  $region53: #{difformer_forward.3} parent=0 // pred_fallthru
    _
  // Predicated region
  $region54: #{difformer_forward.3} parent=0 // pred_check
    _
  $region55: #{difformer_forward.3} parent=0 // pred_check_branch
    %1058 = sbr.rel (0) target = $region57
  $region56: #{difformer_forward.3} parent=0 // pred_region
    _
  $region57: #{difformer_forward.3} parent=0 // pred_fallthru
    _

</llo_original>
